<compile_context>
chip_gen: v5e
topology: v5e:2x2
jax: 0.10.0
libtpu: 0.0.40
codegen_flags: <defaults>
</compile_context>

<pallas_src>
import functools

import jax
import jax.numpy as jnp
from jax.experimental import pallas as pl
from jax.experimental.pallas import tpu as pltpu

DIMS = [(8, 100), (100, 20), (20, 5), (5, 1)]
IN_DIM = DIMS[0][0]        # 8
OUT_DIM = DIMS[-1][1]      # 1
LANE = 128                 # hidden feature dims zero-padded to lane width
SUBL = 8


def _elu(h):
    # ELU, alpha=1.0 (PyTorch default). exp(inf) on the untaken positive
    # branch is safely masked by jnp.where (no 0*inf anywhere).
    return jnp.where(h > 0, h, jnp.exp(h) - 1.0)


def _mlp_kernel(x_ref, w1t_ref, wst_ref, w4_ref, b_ref, o_ref):
    """One batch tile of the 4-layer MLP; batch on lanes.

    x_ref  : (8, tb)        bf16  x^T (features on sublanes, batch on lanes)
    w1t_ref: (128, 8)       bf16  W1^T, out-dim zero-padded to 128
    wst_ref: (2, 128, 128)  bf16  W2^T, W3^T, zero-padded
    w4_ref : (8, 1)         f32   W4 column (5 real + 3 zero rows)
    b_ref  : (4, 128, 1)    f32   biases as columns, zero-padded
    o_ref  : (1, tb)        f32   final output row (lane-dense)
    """
    # layer 1: (128,8) @ (8,tb) -> (128,tb), f32 accumulation
    h = jnp.dot(w1t_ref[...], x_ref[...], preferred_element_type=jnp.float32)
    h = _elu(h + b_ref[0])
    # layers 2-3, unrolled
    for l in range(2):
        h = jnp.dot(wst_ref[l], h.astype(jnp.bfloat16),
                    preferred_element_type=jnp.float32)
        h = _elu(h + b_ref[l + 1])
    # layer 4 (5 -> 1): rows >= 5 of h are exactly zero, so an 8-row VPU
    # multiply + sublane reduce replaces the padded 128x128 MXU matmul.
    o = jnp.sum(h[0:SUBL, :] * w4_ref[...], axis=0, keepdims=True)
    o_ref[...] = _elu(o + b_ref[3][0:1, :]).astype(o_ref.dtype)


def _round_up(n, m):
    return -(-n // m) * m


def _pick_tiling(b):
    """Bucketed (tile, padded_batch): a handful of compile variants, and
    >= 2 grid steps once B > 512 so both v7x TensorCores get work."""
    if b <= 512:
        return 512, 512                       # grid = 1 (launch-bound anyway)
    if b <= 1024:
        return 512, 1024                      # grid = 2
    tb = 1024 if b <= 8192 else 2048
    return tb, _round_up(b, tb)


def prepare_params(params):
    """Pad / transpose / cast the weights ONCE, outside the per-call hot path.

    params: list of 4 (W, b) pairs with W:(in, out), b:(out,).
    Returns (w1t:(128,8) bf16, wst:(2,128,128) bf16, w4c:(8,1) f32,
             bst:(4,128,1) f32).
    """
    (w1, b1), (w2, b2), (w3, b3), (w4, b4) = params

    def pad_t(w, rows, cols):                 # (in,out) -> zero-padded W^T
        wt = w.T
        return jnp.pad(wt, ((0, rows - wt.shape[0]), (0, cols - wt.shape[1])))

    w1t = pad_t(w1, LANE, IN_DIM).astype(jnp.bfloat16)                # (128, 8)
    wst = jnp.stack([pad_t(w2, LANE, LANE),
                     pad_t(w3, LANE, LANE)]).astype(jnp.bfloat16)     # (2,128,128)
    w4c = jnp.pad(w4, ((0, SUBL - w4.shape[0]), (0, 0)))              # (8, 1)
    bst = jnp.stack([jnp.pad(b, (0, LANE - b.shape[0]))[:, None]
                     for b in (b1, b2, b3, b4)])                      # (4,128,1)
    return w1t, wst, w4c, bst


@functools.partial(jax.jit, static_argnames=("tb", "bp"))
def _forward(x, w1t, wst, w4c, bst, *, tb, bp):
    B = x.shape[0]
    # batch goes on lanes: transpose, cast to bf16, pad lanes to the tile grid
    xt = jnp.pad(x.T.astype(jnp.bfloat16), ((0, 0), (0, bp - B)))

    out = pl.pallas_call(
        _mlp_kernel,
        out_shape=jax.ShapeDtypeStruct((1, bp), jnp.float32),
        grid_spec=pltpu.PrefetchScalarGridSpec(
            num_scalar_prefetch=0,
            grid=(bp // tb,),
            in_specs=[
                pl.BlockSpec((SUBL, tb), lambda i: (0, i)),           # x^T tile
                pl.BlockSpec((LANE, IN_DIM), lambda i: (0, 0)),       # W1^T (resident)
                pl.BlockSpec((2, LANE, LANE), lambda i: (0, 0, 0)),   # W2^T, W3^T
                pl.BlockSpec((SUBL, OUT_DIM), lambda i: (0, 0)),      # W4 column
                pl.BlockSpec((4, LANE, 1), lambda i: (0, 0, 0)),      # biases
            ],
            out_specs=pl.BlockSpec((1, tb), lambda i: (0, i)),        # lane-dense
        ),
        compiler_params=pltpu.CompilerParams(
            dimension_semantics=("parallel",)),   # v7x: shard tiles over 2 TCs
    )(xt, w1t, wst, w4c, bst)

    return out[0, :B][:, None]


def retail_model_forward(x, prepared):
    """x: (B, 8) float32 -> (B, 1) float32, matching RetailModel.forward."""
    tb, bp = _pick_tiling(x.shape[0])
    return _forward(x, *prepared, tb=tb, bp=bp)


def init_params(key):
    """Deterministic init mimicking nn.Linear default (uniform +-1/sqrt(in))."""
    params = []
    for (in_dim, out_dim) in DIMS:
        key, kw, kb = jax.random.split(key, 3)
        bound = 1.0 / jnp.sqrt(in_dim)
        W = jax.random.uniform(kw, (in_dim, out_dim), jnp.float32, -bound, bound)
        b = jax.random.uniform(kb, (out_dim,), jnp.float32, -bound, bound)
        params.append((W, b))
    return params


def reference_forward(x, params):
    h = x
    for (W, b) in params:
        h = _elu(h @ W + b)
    return h


if __name__ == "__main__":
    key = jax.random.PRNGKey(0)
    key, kx = jax.random.split(key)

    params = init_params(key)
    prepared = prepare_params(params)

    # Small shape consistent with the module: (batch=8, features=8).
    x = jax.random.normal(kx, (8, IN_DIM), jnp.float32)
    out = retail_model_forward(x, prepared)
    jax.block_until_ready(out)
    ref = reference_forward(x, params)
    assert out.shape == (8, OUT_DIM), out.shape
    # bf16 MXU operands -> loosened tolerance vs the f32 reference
    assert jnp.allclose(out, ref, atol=5e-2, rtol=5e-2), "mismatch vs reference"

    # Multi-tile path: B > 1024 -> 2 grid steps (parallel axis + lane padding
    # on the last tile).
    x2 = jax.random.normal(jax.random.fold_in(kx, 1), (1050, IN_DIM), jnp.float32)
    out2 = retail_model_forward(x2, prepared)
    jax.block_until_ready(out2)
    ref2 = reference_forward(x2, params)
    assert out2.shape == (1050, OUT_DIM), out2.shape
    assert jnp.allclose(out2, ref2, atol=5e-2, rtol=5e-2), "mismatch vs reference"

    print("KERNEL_OK")
</pallas_src>

<mosaic_0001>
module attributes {stable_mosaic.version = 11 : i64} {
  func.func @_mlp_kernel(%arg0: i32, %arg1: memref<8x512xbf16, #tpu.memory_space<vmem>>, %arg2: memref<128x8xbf16, #tpu.memory_space<vmem>>, %arg3: memref<2x128x128xbf16, #tpu.memory_space<vmem>>, %arg4: memref<8x1xf32, #tpu.memory_space<vmem>>, %arg5: memref<4x128x1xf32, #tpu.memory_space<vmem>>, %arg6: memref<1x512xf32, #tpu.memory_space<vmem>>) attributes {dimension_semantics = [#tpu.dimension_semantics<parallel>], iteration_bounds = array<i64: 1>, scalar_prefetch = 0 : i64, scratch_operands = 0 : i64, tpu.core_type = #tpu.core_type<tc>, window_params = [{transform_indices = @transform_0, window_bounds = array<i64: 8, 512>}, {pipeline_mode = #tpu.pipeline_mode<synchronous>, transform_indices = @transform_1, window_bounds = array<i64: 128, 8>}, {pipeline_mode = #tpu.pipeline_mode<synchronous>, transform_indices = @transform_2, window_bounds = array<i64: 2, 128, 128>}, {pipeline_mode = #tpu.pipeline_mode<synchronous>, transform_indices = @transform_3, window_bounds = array<i64: 8, 1>}, {pipeline_mode = #tpu.pipeline_mode<synchronous>, transform_indices = @transform_4, window_bounds = array<i64: 4, 128, 1>}, {transform_indices = @transform_5, window_bounds = array<i64: 1, 512>}]} {
    %c0 = arith.constant 0 : index
    %c0_0 = arith.constant 0 : index
    %0 = vector.load %arg2[%c0, %c0_0] : memref<128x8xbf16, #tpu.memory_space<vmem>>, vector<128x8xbf16>
    %c0_1 = arith.constant 0 : index
    %c0_2 = arith.constant 0 : index
    %1 = vector.load %arg1[%c0_1, %c0_2] : memref<8x512xbf16, #tpu.memory_space<vmem>>, vector<8x512xbf16>
    %cst = arith.constant dense<0.000000e+00> : vector<128x512xf32>
    %2 = tpu.matmul %0, %1, %cst {dimension_numbers = #tpu.dot_dimension_numbers<[1], [0], [0], [1], [0, 0, 1, 1], [], []>} : vector<128x8xbf16>, vector<8x512xbf16>, vector<128x512xf32> -> vector<128x512xf32>
    %c0_3 = arith.constant 0 : index
    %c0_4 = arith.constant 0 : index
    %c0_5 = arith.constant 0 : index
    %3 = vector.load %arg5[%c0_3, %c0_4, %c0_5] : memref<4x128x1xf32, #tpu.memory_space<vmem>>, vector<1x128x1xf32>
    %4 = vector.shape_cast %3 : vector<1x128x1xf32> to vector<128x1xf32>
    %5 = vector.broadcast %4 : vector<128x1xf32> to vector<128x512xf32>
    %6 = arith.addf %2, %5 : vector<128x512xf32>
    %cst_6 = arith.constant 0.000000e+00 : f32
    %7 = vector.broadcast %cst_6 : f32 to vector<128x512xf32>
    %8 = arith.cmpf ogt, %6, %7 : vector<128x512xf32>
    %9 = math.exp %6 : vector<128x512xf32>
    %cst_7 = arith.constant 1.000000e+00 : f32
    %10 = vector.broadcast %cst_7 : f32 to vector<128x512xf32>
    %11 = arith.subf %9, %10 : vector<128x512xf32>
    %12 = arith.select %8, %6, %11 : vector<128x512xi1>, vector<128x512xf32>
    %c0_8 = arith.constant 0 : index
    %c0_9 = arith.constant 0 : index
    %c0_10 = arith.constant 0 : index
    %13 = vector.load %arg3[%c0_8, %c0_9, %c0_10] : memref<2x128x128xbf16, #tpu.memory_space<vmem>>, vector<1x128x128xbf16>
    %14 = vector.shape_cast %13 : vector<1x128x128xbf16> to vector<128x128xbf16>
    %15 = arith.truncf %12 : vector<128x512xf32> to vector<128x512xbf16>
    %cst_11 = arith.constant dense<0.000000e+00> : vector<128x512xf32>
    %16 = tpu.matmul %14, %15, %cst_11 {dimension_numbers = #tpu.dot_dimension_numbers<[1], [0], [0], [1], [0, 0, 1, 1], [], []>} : vector<128x128xbf16>, vector<128x512xbf16>, vector<128x512xf32> -> vector<128x512xf32>
    %c1 = arith.constant 1 : index
    %c0_12 = arith.constant 0 : index
    %c0_13 = arith.constant 0 : index
    %17 = vector.load %arg5[%c1, %c0_12, %c0_13] : memref<4x128x1xf32, #tpu.memory_space<vmem>>, vector<1x128x1xf32>
    %18 = vector.shape_cast %17 : vector<1x128x1xf32> to vector<128x1xf32>
    %19 = vector.broadcast %18 : vector<128x1xf32> to vector<128x512xf32>
    %20 = arith.addf %16, %19 : vector<128x512xf32>
    %cst_14 = arith.constant 0.000000e+00 : f32
    %21 = vector.broadcast %cst_14 : f32 to vector<128x512xf32>
    %22 = arith.cmpf ogt, %20, %21 : vector<128x512xf32>
    %23 = math.exp %20 : vector<128x512xf32>
    %cst_15 = arith.constant 1.000000e+00 : f32
    %24 = vector.broadcast %cst_15 : f32 to vector<128x512xf32>
    %25 = arith.subf %23, %24 : vector<128x512xf32>
    %26 = arith.select %22, %20, %25 : vector<128x512xi1>, vector<128x512xf32>
    %c1_16 = arith.constant 1 : index
    %c0_17 = arith.constant 0 : index
    %c0_18 = arith.constant 0 : index
    %27 = vector.load %arg3[%c1_16, %c0_17, %c0_18] : memref<2x128x128xbf16, #tpu.memory_space<vmem>>, vector<1x128x128xbf16>
    %28 = vector.shape_cast %27 : vector<1x128x128xbf16> to vector<128x128xbf16>
    %29 = arith.truncf %26 : vector<128x512xf32> to vector<128x512xbf16>
    %cst_19 = arith.constant dense<0.000000e+00> : vector<128x512xf32>
    %30 = tpu.matmul %28, %29, %cst_19 {dimension_numbers = #tpu.dot_dimension_numbers<[1], [0], [0], [1], [0, 0, 1, 1], [], []>} : vector<128x128xbf16>, vector<128x512xbf16>, vector<128x512xf32> -> vector<128x512xf32>
    %c2 = arith.constant 2 : index
    %c0_20 = arith.constant 0 : index
    %c0_21 = arith.constant 0 : index
    %31 = vector.load %arg5[%c2, %c0_20, %c0_21] : memref<4x128x1xf32, #tpu.memory_space<vmem>>, vector<1x128x1xf32>
    %32 = vector.shape_cast %31 : vector<1x128x1xf32> to vector<128x1xf32>
    %33 = vector.broadcast %32 : vector<128x1xf32> to vector<128x512xf32>
    %34 = arith.addf %30, %33 : vector<128x512xf32>
    %cst_22 = arith.constant 0.000000e+00 : f32
    %35 = vector.broadcast %cst_22 : f32 to vector<128x512xf32>
    %36 = arith.cmpf ogt, %34, %35 : vector<128x512xf32>
    %37 = math.exp %34 : vector<128x512xf32>
    %cst_23 = arith.constant 1.000000e+00 : f32
    %38 = vector.broadcast %cst_23 : f32 to vector<128x512xf32>
    %39 = arith.subf %37, %38 : vector<128x512xf32>
    %40 = arith.select %36, %34, %39 : vector<128x512xi1>, vector<128x512xf32>
    %41 = vector.extract_strided_slice %40 {offsets = [0, 0], sizes = [8, 512], strides = [1, 1]} : vector<128x512xf32> to vector<8x512xf32>
    %c0_24 = arith.constant 0 : index
    %c0_25 = arith.constant 0 : index
    %42 = vector.load %arg4[%c0_24, %c0_25] : memref<8x1xf32, #tpu.memory_space<vmem>>, vector<8x1xf32>
    %43 = vector.broadcast %42 : vector<8x1xf32> to vector<8x512xf32>
    %44 = arith.mulf %41, %43 : vector<8x512xf32>
    %cst_26 = arith.constant dense<0.000000e+00> : vector<512xf32>
    %45 = vector.multi_reduction <add>, %44, %cst_26 [0] : vector<8x512xf32> to vector<512xf32>
    %46 = vector.shape_cast %45 : vector<512xf32> to vector<1x512xf32>
    %c3 = arith.constant 3 : index
    %c0_27 = arith.constant 0 : index
    %c0_28 = arith.constant 0 : index
    %47 = vector.load %arg5[%c3, %c0_27, %c0_28] : memref<4x128x1xf32, #tpu.memory_space<vmem>>, vector<1x128x1xf32>
    %48 = vector.shape_cast %47 : vector<1x128x1xf32> to vector<128x1xf32>
    %49 = vector.extract_strided_slice %48 {offsets = [0, 0], sizes = [1, 1], strides = [1, 1]} : vector<128x1xf32> to vector<1x1xf32>
    %50 = vector.broadcast %49 : vector<1x1xf32> to vector<1x512xf32>
    %51 = arith.addf %46, %50 : vector<1x512xf32>
    %cst_29 = arith.constant 0.000000e+00 : f32
    %52 = vector.broadcast %cst_29 : f32 to vector<1x512xf32>
    %53 = arith.cmpf ogt, %51, %52 : vector<1x512xf32>
    %54 = math.exp %51 : vector<1x512xf32>
    %cst_30 = arith.constant 1.000000e+00 : f32
    %55 = vector.broadcast %cst_30 : f32 to vector<1x512xf32>
    %56 = arith.subf %54, %55 : vector<1x512xf32>
    %57 = arith.select %53, %51, %56 : vector<1x512xi1>, vector<1x512xf32>
    %c0_31 = arith.constant 0 : index
    %c0_32 = arith.constant 0 : index
    %58 = vector.load %arg6[%c0_31, %c0_32] : memref<1x512xf32, #tpu.memory_space<vmem>>, vector<1x512xf32>
    tpu.vector_store %arg6[%c0_31, %c0_32], %57 {strides = array<i32>} : memref<1x512xf32, #tpu.memory_space<vmem>>, vector<1x512xf32>,
    return
  }
  func.func @transform_0(%arg0: i32) -> (i32, i32) {
    %c0_i32 = arith.constant 0 : i32
    %c0_i32_0 = arith.constant 0 : i32
    return %c0_i32, %arg0 : i32, i32
  }
  func.func @transform_1(%arg0: i32) -> (i32, i32) {
    %c0_i32 = arith.constant 0 : i32
    %c0_i32_0 = arith.constant 0 : i32
    %c0_i32_1 = arith.constant 0 : i32
    return %c0_i32, %c0_i32_0 : i32, i32
  }
  func.func @transform_2(%arg0: i32) -> (i32, i32, i32) {
    %c0_i32 = arith.constant 0 : i32
    %c0_i32_0 = arith.constant 0 : i32
    %c0_i32_1 = arith.constant 0 : i32
    %c0_i32_2 = arith.constant 0 : i32
    return %c0_i32, %c0_i32_0, %c0_i32_1 : i32, i32, i32
  }
  func.func @transform_3(%arg0: i32) -> (i32, i32) {
    %c0_i32 = arith.constant 0 : i32
    %c0_i32_0 = arith.constant 0 : i32
    %c0_i32_1 = arith.constant 0 : i32
    return %c0_i32, %c0_i32_0 : i32, i32
  }
  func.func @transform_4(%arg0: i32) -> (i32, i32, i32) {
    %c0_i32 = arith.constant 0 : i32
    %c0_i32_0 = arith.constant 0 : i32
    %c0_i32_1 = arith.constant 0 : i32
    %c0_i32_2 = arith.constant 0 : i32
    return %c0_i32, %c0_i32_0, %c0_i32_1 : i32, i32, i32
  }
  func.func @transform_5(%arg0: i32) -> (i32, i32) {
    %c0_i32 = arith.constant 0 : i32
    %c0_i32_0 = arith.constant 0 : i32
    return %c0_i32, %arg0 : i32, i32
  }
}

</mosaic_0001>

<llo_original>
// kernel: _forward.1
$region0: #{_forward.1}
  #allocation0 [shape = 'u32[]', space=smem, size = 0x4, offset = 0x4, fixed_abs, tag = 'smem constant byte address 0x4 - core index']
  #allocation1 [shape = 'u32[72,128]{1,0:T(1,128)}', space=vmem, size = 0x9000, scoped, tag = 'internal scratch']
  %s0 = inlined_call_operand.vmem [shape: bf16[8,512], index: 0, kind: input, shape index: {}]
  %s1 = inlined_call_operand.vmem [shape: bf16[128,8], index: 1, kind: input, shape index: {}]
  %s2 = inlined_call_operand.vmem [shape: bf16[2,128,128], index: 2, kind: input, shape index: {}]
  %s3 = inlined_call_operand.vmem [shape: f32[8,1], index: 3, kind: input, shape index: {}]
  %s4 = inlined_call_operand.vmem [shape: f32[4,128,1], index: 4, kind: input, shape index: {}]
  %s5 = inlined_call_operand.vmem [shape: f32[1,512], index: 5, kind: output, shape index: {}]
  %s6 = sld [smem:[#allocation0]]
  $region30: #{_forward.1} parent=0
    _
  %s8 = ssub.s32 1, %s6
  %s9 = scalar_select 0, %s8, %s6
  // Predicated region
  $region2: #{_forward.1} parent=0 // pred_check
    _
  $region3: #{_forward.1} parent=0 // pred_check_branch
    %11 = sbr.rel (0) target = $region5
  $region4: #{_forward.1} parent=0 // pred_region
    _
  $region5: #{_forward.1} parent=0 // pred_fallthru
    _
  // Predicated region
  $region6: #{_forward.1} parent=0 // pred_check
    _
  $region7: #{_forward.1} parent=0 // pred_check_branch
    %13 = sbr.rel (0) target = $region9
  $region8: #{_forward.1} parent=0 // pred_region
    _
  $region9: #{_forward.1} parent=0 // pred_fallthru
    _
  // Predicated region
  $region10: #{_forward.1} parent=0 // pred_check
    _
  $region11: #{_forward.1} parent=0 // pred_check_branch
    %15 = sbr.rel (0) target = $region13
  $region12: #{_forward.1} parent=0 // pred_region
    _
  $region13: #{_forward.1} parent=0 // pred_fallthru
    _
  // Predicated region
  $region14: #{_forward.1} parent=0 // pred_check
    _
  $region15: #{_forward.1} parent=0 // pred_check_branch
    %17 = sbr.rel (0) target = $region17
  $region16: #{_forward.1} parent=0 // pred_region
    _
  $region17: #{_forward.1} parent=0 // pred_fallthru
    _
  // Predicated region
  $region18: #{_forward.1} parent=0 // pred_check
    _
  $region19: #{_forward.1} parent=0 // pred_check_branch
    %19 = sbr.rel (0) target = $region21
  $region20: #{_forward.1} parent=0 // pred_region
    _
  $region21: #{_forward.1} parent=0 // pred_fallthru
    _
  %v21 = vld [vmem:[%s1] sm:$0xf]
  %v22 = vld [vmem:[%s1 + $0x4] sm:$0xf]
  %v23 = vld [vmem:[%s1 + $0x8] sm:$0xf]
  %v24 = vld [vmem:[%s1 + $0xc] sm:$0xf]
  %v25 = vld [vmem:[%s1 + $0x10] sm:$0xf]
  %v26 = vld [vmem:[%s1 + $0x14] sm:$0xf]
  %v27 = vld [vmem:[%s1 + $0x18] sm:$0xf]
  %v28 = vld [vmem:[%s1 + $0x1c] sm:$0xf]
  %v29 = vld [vmem:[%s1 + $0x20] sm:$0xf]
  %v30 = vld [vmem:[%s1 + $0x24] sm:$0xf]
  %v31 = vld [vmem:[%s1 + $0x28] sm:$0xf]
  %v32 = vld [vmem:[%s1 + $0x2c] sm:$0xf]
  %v33 = vld [vmem:[%s1 + $0x30] sm:$0xf]
  %v34 = vld [vmem:[%s1 + $0x34] sm:$0xf]
  %v35 = vld [vmem:[%s1 + $0x38] sm:$0xf]
  %v36 = vld [vmem:[%s1 + $0x3c] sm:$0xf]
  %v37 = vld [vmem:[%s0] sm:$0xff]
  %v38 = vld [vmem:[%s0 + $0x8] sm:$0xff]
  %v39 = vld [vmem:[%s4] sm:$0xff]
  %v40 = vld [vmem:[%s4 + $0x8] sm:$0xff]
  %v41 = vld [vmem:[%s4 + $0x10] sm:$0xff]
  %v42 = vld [vmem:[%s4 + $0x18] sm:$0xff]
  %v43 = vld [vmem:[%s4 + $0x20] sm:$0xff]
  %v44 = vld [vmem:[%s4 + $0x28] sm:$0xff]
  %v45 = vld [vmem:[%s4 + $0x30] sm:$0xff]
  %v46 = vld [vmem:[%s4 + $0x38] sm:$0xff]
  %v47 = vld [vmem:[%s4 + $0x40] sm:$0xff]
  %v48 = vld [vmem:[%s4 + $0x48] sm:$0xff]
  %v49 = vld [vmem:[%s4 + $0x50] sm:$0xff]
  %v50 = vld [vmem:[%s4 + $0x58] sm:$0xff]
  %v51 = vld [vmem:[%s4 + $0x60] sm:$0xff]
  %v52 = vld [vmem:[%s4 + $0x68] sm:$0xff]
  %v53 = vld [vmem:[%s4 + $0x70] sm:$0xff]
  %v54 = vld [vmem:[%s4 + $0x78] sm:$0xff]
  %56 = vset.pattern.permute.xlu0 0
  %57 = vperm.xlu0 %56, %v39
  %v58 = vpop.permute.xlu0 %57
  %61 = vset.pattern.permute.xlu0 0
  %62 = vperm.xlu0 %61, %v40
  %v63 = vpop.permute.xlu0 %62
  %66 = vset.pattern.permute.xlu0 0
  %67 = vperm.xlu0 %66, %v41
  %v68 = vpop.permute.xlu0 %67
  %71 = vset.pattern.permute.xlu0 0
  %72 = vperm.xlu0 %71, %v42
  %v73 = vpop.permute.xlu0 %72
  %76 = vset.pattern.permute.xlu0 0
  %77 = vperm.xlu0 %76, %v43
  %v78 = vpop.permute.xlu0 %77
  %81 = vset.pattern.permute.xlu0 0
  %82 = vperm.xlu0 %81, %v44
  %v83 = vpop.permute.xlu0 %82
  %86 = vset.pattern.permute.xlu0 0
  %87 = vperm.xlu0 %86, %v45
  %v88 = vpop.permute.xlu0 %87
  %91 = vset.pattern.permute.xlu0 0
  %92 = vperm.xlu0 %91, %v46
  %v93 = vpop.permute.xlu0 %92
  %96 = vset.pattern.permute.xlu0 0
  %97 = vperm.xlu0 %96, %v47
  %v98 = vpop.permute.xlu0 %97
  %101 = vset.pattern.permute.xlu0 0
  %102 = vperm.xlu0 %101, %v48
  %v103 = vpop.permute.xlu0 %102
  %106 = vset.pattern.permute.xlu0 0
  %107 = vperm.xlu0 %106, %v49
  %v108 = vpop.permute.xlu0 %107
  %111 = vset.pattern.permute.xlu0 0
  %112 = vperm.xlu0 %111, %v50
  %v113 = vpop.permute.xlu0 %112
  %116 = vset.pattern.permute.xlu0 0
  %117 = vperm.xlu0 %116, %v51
  %v118 = vpop.permute.xlu0 %117
  %121 = vset.pattern.permute.xlu0 0
  %122 = vperm.xlu0 %121, %v52
  %v123 = vpop.permute.xlu0 %122
  %126 = vset.pattern.permute.xlu0 0
  %127 = vperm.xlu0 %126, %v53
  %v128 = vpop.permute.xlu0 %127
  %131 = vset.pattern.permute.xlu0 0
  %132 = vperm.xlu0 %131, %v54
  %v133 = vpop.permute.xlu0 %132
  %v151 = vunpack.c.l.b16 %v21
  %v152 = vunpack.c.l.b16 %v22
  %v153 = vunpack.c.l.b16 %v23
  %v154 = vunpack.c.l.b16 %v24
  %v155 = vunpack.c.l.b16 %v25
  %v156 = vunpack.c.l.b16 %v26
  %v157 = vunpack.c.l.b16 %v27
  %v158 = vunpack.c.l.b16 %v28
  %v159 = vunpack.c.l.b16 %v29
  %v160 = vunpack.c.l.b16 %v30
  %v161 = vunpack.c.l.b16 %v31
  %v162 = vunpack.c.l.b16 %v32
  %v163 = vunpack.c.l.b16 %v33
  %v164 = vunpack.c.l.b16 %v34
  %v165 = vunpack.c.l.b16 %v35
  %v166 = vunpack.c.l.b16 %v36
  %v167 = vpack.c.b16 %v152, %v151
  %v168 = vpack.c.b16 %v154, %v153
  %v169 = vpack.c.b16 %v156, %v155
  %v170 = vpack.c.b16 %v158, %v157
  %v171 = vpack.c.b16 %v160, %v159
  %v172 = vpack.c.b16 %v162, %v161
  %v173 = vpack.c.b16 %v164, %v163
  %v174 = vpack.c.b16 %v166, %v165
  %v177 = vunpack.c.l.b16 %v37
  %v178 = vunpack.c.h.b16 %v37
  %v179 = vunpack.c.l.b16 %v38
  %v180 = vunpack.c.h.b16 %v38
  %v181 = vpack.c.b16 %v177, %v177
  %v182 = vpack.c.b16 %v178, %v178
  %v183 = vpack.c.b16 %v179, %v179
  %v184 = vpack.c.b16 %v180, %v180
  %vm185 = vcmask 64512
  %v187 = vsel %vm185, %v167, 0
  %v190 = vsel %vm185, %v168, 0
  %v193 = vsel %vm185, %v169, 0
  %v196 = vsel %vm185, %v170, 0
  %v199 = vsel %vm185, %v171, 0
  %v202 = vsel %vm185, %v172, 0
  %v205 = vsel %vm185, %v173, 0
  %v208 = vsel %vm185, %v174, 0
  %vm210 = vcmask 1043456
  %v212 = vsel %vm210, %v181, 0
  %v215 = vsel %vm210, %v182, 0
  %v218 = vsel %vm210, %v183, 0
  %v221 = vsel %vm210, %v184, 0
  %223 = vmatpush.bf16.msra.mxu0 0
  %224 = vmatpush.bf16.msra.mxu0 0
  %225 = vmatpush.bf16.msra.mxu0 0
  %226 = vmatpush.bf16.msra.mxu0 0
  %227 = vmatpush.bf16.msra.mxu0 0
  %228 = vmatpush.bf16.msra.mxu0 0
  %229 = vmatpush.bf16.msra.mxu0 0
  %230 = vmatpush.bf16.msra.mxu0 %v212
  %231 = vmatmul.bf16.gmra.mxu0 %v187
  %v232 = vpop.f32.mrf.mxu0
  %v233 = vadd.f32 %v58, %v232
  %v234 = vpop.f32.mrf.mxu0
  %v235 = vadd.f32 %v63, %v234
  %236 = vmatmul.bf16.gmra.mxu0 %v190
  %v237 = vpop.f32.mrf.mxu0
  %v238 = vadd.f32 %v68, %v237
  %v239 = vpop.f32.mrf.mxu0
  %v240 = vadd.f32 %v73, %v239
  %241 = vmatmul.bf16.gmra.mxu0 %v193
  %v242 = vpop.f32.mrf.mxu0
  %v243 = vadd.f32 %v78, %v242
  %v244 = vpop.f32.mrf.mxu0
  %v245 = vadd.f32 %v83, %v244
  %246 = vmatmul.bf16.gmra.mxu0 %v196
  %v247 = vpop.f32.mrf.mxu0
  %v248 = vadd.f32 %v88, %v247
  %v249 = vpop.f32.mrf.mxu0
  %v250 = vadd.f32 %v93, %v249
  %251 = vmatmul.bf16.gmra.mxu0 %v199
  %v252 = vpop.f32.mrf.mxu0
  %v253 = vadd.f32 %v98, %v252
  %v254 = vpop.f32.mrf.mxu0
  %v255 = vadd.f32 %v103, %v254
  %256 = vmatmul.bf16.gmra.mxu0 %v202
  %v257 = vpop.f32.mrf.mxu0
  %v258 = vadd.f32 %v108, %v257
  %v259 = vpop.f32.mrf.mxu0
  %v260 = vadd.f32 %v113, %v259
  %261 = vmatmul.bf16.gmra.mxu0 %v205
  %v262 = vpop.f32.mrf.mxu0
  %v263 = vadd.f32 %v118, %v262
  %v264 = vpop.f32.mrf.mxu0
  %v265 = vadd.f32 %v123, %v264
  %266 = vmatmul.bf16.gmra.mxu0 %v208
  %v267 = vpop.f32.mrf.mxu0
  %v268 = vadd.f32 %v128, %v267
  %v269 = vpop.f32.mrf.mxu0
  %v270 = vadd.f32 %v133, %v269
  %271 = vdwg.mxu0
  %272 = vmatpush.bf16.msra.mxu0 0
  %273 = vmatpush.bf16.msra.mxu0 0
  %274 = vmatpush.bf16.msra.mxu0 0
  %275 = vmatpush.bf16.msra.mxu0 0
  %276 = vmatpush.bf16.msra.mxu0 0
  %277 = vmatpush.bf16.msra.mxu0 0
  %278 = vmatpush.bf16.msra.mxu0 0
  %279 = vmatpush.bf16.msra.mxu0 %v215
  %280 = vmatmul.bf16.gmra.mxu0 %v187
  %v281 = vpop.f32.mrf.mxu0
  %v282 = vadd.f32 %v58, %v281
  %v283 = vpop.f32.mrf.mxu0
  %v284 = vadd.f32 %v63, %v283
  %285 = vmatmul.bf16.gmra.mxu0 %v190
  %v286 = vpop.f32.mrf.mxu0
  %v287 = vadd.f32 %v68, %v286
  %v288 = vpop.f32.mrf.mxu0
  %v289 = vadd.f32 %v73, %v288
  %290 = vmatmul.bf16.gmra.mxu0 %v193
  %v291 = vpop.f32.mrf.mxu0
  %v292 = vadd.f32 %v78, %v291
  %v293 = vpop.f32.mrf.mxu0
  %v294 = vadd.f32 %v83, %v293
  %295 = vmatmul.bf16.gmra.mxu0 %v196
  %v296 = vpop.f32.mrf.mxu0
  %v297 = vadd.f32 %v88, %v296
  %v298 = vpop.f32.mrf.mxu0
  %v299 = vadd.f32 %v93, %v298
  %300 = vmatmul.bf16.gmra.mxu0 %v199
  %v301 = vpop.f32.mrf.mxu0
  %v302 = vadd.f32 %v98, %v301
  %v303 = vpop.f32.mrf.mxu0
  %v304 = vadd.f32 %v103, %v303
  %305 = vmatmul.bf16.gmra.mxu0 %v202
  %v306 = vpop.f32.mrf.mxu0
  %v307 = vadd.f32 %v108, %v306
  %v308 = vpop.f32.mrf.mxu0
  %v309 = vadd.f32 %v113, %v308
  %310 = vmatmul.bf16.gmra.mxu0 %v205
  %v311 = vpop.f32.mrf.mxu0
  %v312 = vadd.f32 %v118, %v311
  %v313 = vpop.f32.mrf.mxu0
  %v314 = vadd.f32 %v123, %v313
  %315 = vmatmul.bf16.gmra.mxu0 %v208
  %v316 = vpop.f32.mrf.mxu0
  %v317 = vadd.f32 %v128, %v316
  %v318 = vpop.f32.mrf.mxu0
  %v319 = vadd.f32 %v133, %v318
  %320 = vdwg.mxu0
  %321 = vmatpush.bf16.msra.mxu0 0
  %322 = vmatpush.bf16.msra.mxu0 0
  %323 = vmatpush.bf16.msra.mxu0 0
  %324 = vmatpush.bf16.msra.mxu0 0
  %325 = vmatpush.bf16.msra.mxu0 0
  %326 = vmatpush.bf16.msra.mxu0 0
  %327 = vmatpush.bf16.msra.mxu0 0
  %328 = vmatpush.bf16.msra.mxu0 %v218
  %329 = vmatmul.bf16.gmra.mxu0 %v187
  %v330 = vpop.f32.mrf.mxu0
  %v331 = vadd.f32 %v58, %v330
  %v332 = vpop.f32.mrf.mxu0
  %v333 = vadd.f32 %v63, %v332
  %334 = vmatmul.bf16.gmra.mxu0 %v190
  %v335 = vpop.f32.mrf.mxu0
  %v336 = vadd.f32 %v68, %v335
  %v337 = vpop.f32.mrf.mxu0
  %v338 = vadd.f32 %v73, %v337
  %339 = vmatmul.bf16.gmra.mxu0 %v193
  %v340 = vpop.f32.mrf.mxu0
  %v341 = vadd.f32 %v78, %v340
  %v342 = vpop.f32.mrf.mxu0
  %v343 = vadd.f32 %v83, %v342
  %344 = vmatmul.bf16.gmra.mxu0 %v196
  %v345 = vpop.f32.mrf.mxu0
  %v346 = vadd.f32 %v88, %v345
  %v347 = vpop.f32.mrf.mxu0
  %v348 = vadd.f32 %v93, %v347
  %349 = vmatmul.bf16.gmra.mxu0 %v199
  %v350 = vpop.f32.mrf.mxu0
  %v351 = vadd.f32 %v98, %v350
  %v352 = vpop.f32.mrf.mxu0
  %v353 = vadd.f32 %v103, %v352
  %354 = vmatmul.bf16.gmra.mxu0 %v202
  %v355 = vpop.f32.mrf.mxu0
  %v356 = vadd.f32 %v108, %v355
  %v357 = vpop.f32.mrf.mxu0
  %v358 = vadd.f32 %v113, %v357
  %359 = vmatmul.bf16.gmra.mxu0 %v205
  %v360 = vpop.f32.mrf.mxu0
  %v361 = vadd.f32 %v118, %v360
  %v362 = vpop.f32.mrf.mxu0
  %v363 = vadd.f32 %v123, %v362
  %364 = vmatmul.bf16.gmra.mxu0 %v208
  %v365 = vpop.f32.mrf.mxu0
  %v366 = vadd.f32 %v128, %v365
  %v367 = vpop.f32.mrf.mxu0
  %v368 = vadd.f32 %v133, %v367
  %369 = vdwg.mxu0
  %370 = vmatpush.bf16.msra.mxu0 0
  %371 = vmatpush.bf16.msra.mxu0 0
  %372 = vmatpush.bf16.msra.mxu0 0
  %373 = vmatpush.bf16.msra.mxu0 0
  %374 = vmatpush.bf16.msra.mxu0 0
  %375 = vmatpush.bf16.msra.mxu0 0
  %376 = vmatpush.bf16.msra.mxu0 0
  %377 = vmatpush.bf16.msra.mxu0 %v221
  %378 = vmatmul.bf16.gmra.mxu0 %v187
  %v379 = vpop.f32.mrf.mxu0
  %v380 = vadd.f32 %v58, %v379
  %v381 = vpop.f32.mrf.mxu0
  %v382 = vadd.f32 %v63, %v381
  %383 = vmatmul.bf16.gmra.mxu0 %v190
  %v384 = vpop.f32.mrf.mxu0
  %v385 = vadd.f32 %v68, %v384
  %v386 = vpop.f32.mrf.mxu0
  %v387 = vadd.f32 %v73, %v386
  %388 = vmatmul.bf16.gmra.mxu0 %v193
  %v389 = vpop.f32.mrf.mxu0
  %v390 = vadd.f32 %v78, %v389
  %v391 = vpop.f32.mrf.mxu0
  %v392 = vadd.f32 %v83, %v391
  %393 = vmatmul.bf16.gmra.mxu0 %v196
  %v394 = vpop.f32.mrf.mxu0
  %v395 = vadd.f32 %v88, %v394
  %v396 = vpop.f32.mrf.mxu0
  %v397 = vadd.f32 %v93, %v396
  %398 = vmatmul.bf16.gmra.mxu0 %v199
  %v399 = vpop.f32.mrf.mxu0
  %v400 = vadd.f32 %v98, %v399
  %v401 = vpop.f32.mrf.mxu0
  %v402 = vadd.f32 %v103, %v401
  %403 = vmatmul.bf16.gmra.mxu0 %v202
  %v404 = vpop.f32.mrf.mxu0
  %v405 = vadd.f32 %v108, %v404
  %v406 = vpop.f32.mrf.mxu0
  %v407 = vadd.f32 %v113, %v406
  %408 = vmatmul.bf16.gmra.mxu0 %v205
  %v409 = vpop.f32.mrf.mxu0
  %v410 = vadd.f32 %v118, %v409
  %v411 = vpop.f32.mrf.mxu0
  %v412 = vadd.f32 %v123, %v411
  %413 = vmatmul.bf16.gmra.mxu0 %v208
  %v414 = vpop.f32.mrf.mxu0
  %v415 = vadd.f32 %v128, %v414
  %v416 = vpop.f32.mrf.mxu0
  %v417 = vadd.f32 %v133, %v416
  %418 = vdwg.mxu0
  %vm419 = vcmp.gt.f32.partialorder %v233, 0.0
  %vm420 = vcmp.gt.f32.partialorder %v282, 0.0
  %vm421 = vcmp.gt.f32.partialorder %v331, 0.0
  %vm422 = vcmp.gt.f32.partialorder %v380, 0.0
  %vm423 = vcmp.gt.f32.partialorder %v235, 0.0
  %vm424 = vcmp.gt.f32.partialorder %v284, 0.0
  %vm425 = vcmp.gt.f32.partialorder %v333, 0.0
  %vm426 = vcmp.gt.f32.partialorder %v382, 0.0
  %vm427 = vcmp.gt.f32.partialorder %v238, 0.0
  %vm428 = vcmp.gt.f32.partialorder %v287, 0.0
  %vm429 = vcmp.gt.f32.partialorder %v336, 0.0
  %vm430 = vcmp.gt.f32.partialorder %v385, 0.0
  %vm431 = vcmp.gt.f32.partialorder %v240, 0.0
  %vm432 = vcmp.gt.f32.partialorder %v289, 0.0
  %vm433 = vcmp.gt.f32.partialorder %v338, 0.0
  %vm434 = vcmp.gt.f32.partialorder %v387, 0.0
  %vm435 = vcmp.gt.f32.partialorder %v243, 0.0
  %vm436 = vcmp.gt.f32.partialorder %v292, 0.0
  %vm437 = vcmp.gt.f32.partialorder %v341, 0.0
  %vm438 = vcmp.gt.f32.partialorder %v390, 0.0
  %vm439 = vcmp.gt.f32.partialorder %v245, 0.0
  %vm440 = vcmp.gt.f32.partialorder %v294, 0.0
  %vm441 = vcmp.gt.f32.partialorder %v343, 0.0
  %vm442 = vcmp.gt.f32.partialorder %v392, 0.0
  %vm443 = vcmp.gt.f32.partialorder %v248, 0.0
  %vm444 = vcmp.gt.f32.partialorder %v297, 0.0
  %vm445 = vcmp.gt.f32.partialorder %v346, 0.0
  %vm446 = vcmp.gt.f32.partialorder %v395, 0.0
  %vm447 = vcmp.gt.f32.partialorder %v250, 0.0
  %vm448 = vcmp.gt.f32.partialorder %v299, 0.0
  %vm449 = vcmp.gt.f32.partialorder %v348, 0.0
  %vm450 = vcmp.gt.f32.partialorder %v397, 0.0
  %vm451 = vcmp.gt.f32.partialorder %v253, 0.0
  %vm452 = vcmp.gt.f32.partialorder %v302, 0.0
  %vm453 = vcmp.gt.f32.partialorder %v351, 0.0
  %vm454 = vcmp.gt.f32.partialorder %v400, 0.0
  %vm455 = vcmp.gt.f32.partialorder %v255, 0.0
  %vm456 = vcmp.gt.f32.partialorder %v304, 0.0
  %vm457 = vcmp.gt.f32.partialorder %v353, 0.0
  %vm458 = vcmp.gt.f32.partialorder %v402, 0.0
  %vm459 = vcmp.gt.f32.partialorder %v258, 0.0
  %vm460 = vcmp.gt.f32.partialorder %v307, 0.0
  %vm461 = vcmp.gt.f32.partialorder %v356, 0.0
  %vm462 = vcmp.gt.f32.partialorder %v405, 0.0
  %vm463 = vcmp.gt.f32.partialorder %v260, 0.0
  %vm464 = vcmp.gt.f32.partialorder %v309, 0.0
  %vm465 = vcmp.gt.f32.partialorder %v358, 0.0
  %vm466 = vcmp.gt.f32.partialorder %v407, 0.0
  %vm467 = vcmp.gt.f32.partialorder %v263, 0.0
  %vm468 = vcmp.gt.f32.partialorder %v312, 0.0
  %vm469 = vcmp.gt.f32.partialorder %v361, 0.0
  %vm470 = vcmp.gt.f32.partialorder %v410, 0.0
  %vm471 = vcmp.gt.f32.partialorder %v265, 0.0
  %vm472 = vcmp.gt.f32.partialorder %v314, 0.0
  %vm473 = vcmp.gt.f32.partialorder %v363, 0.0
  %vm474 = vcmp.gt.f32.partialorder %v412, 0.0
  %vm475 = vcmp.gt.f32.partialorder %v268, 0.0
  %vm476 = vcmp.gt.f32.partialorder %v317, 0.0
  %vm477 = vcmp.gt.f32.partialorder %v366, 0.0
  %vm478 = vcmp.gt.f32.partialorder %v415, 0.0
  %vm479 = vcmp.gt.f32.partialorder %v270, 0.0
  %vm480 = vcmp.gt.f32.partialorder %v319, 0.0
  %vm481 = vcmp.gt.f32.partialorder %v368, 0.0
  %vm482 = vcmp.gt.f32.partialorder %v417, 0.0
  %v483 = vmul.f32 %v233, 1.442695
  %v484 = vpow.pop %v483
  %v485 = vmul.f32 %v282, 1.442695
  %v486 = vpow.pop %v485
  %v487 = vmul.f32 %v331, 1.442695
  %v488 = vpow.pop %v487
  %v489 = vmul.f32 %v380, 1.442695
  %v490 = vpow.pop %v489
  %v491 = vmul.f32 %v235, 1.442695
  %v492 = vpow.pop %v491
  %v493 = vmul.f32 %v284, 1.442695
  %v494 = vpow.pop %v493
  %v495 = vmul.f32 %v333, 1.442695
  %v496 = vpow.pop %v495
  %v497 = vmul.f32 %v382, 1.442695
  %v498 = vpow.pop %v497
  %v499 = vmul.f32 %v238, 1.442695
  %v500 = vpow.pop %v499
  %v501 = vmul.f32 %v287, 1.442695
  %v502 = vpow.pop %v501
  %v503 = vmul.f32 %v336, 1.442695
  %v504 = vpow.pop %v503
  %v505 = vmul.f32 %v385, 1.442695
  %v506 = vpow.pop %v505
  %v507 = vmul.f32 %v240, 1.442695
  %v508 = vpow.pop %v507
  %v509 = vmul.f32 %v289, 1.442695
  %v510 = vpow.pop %v509
  %v511 = vmul.f32 %v338, 1.442695
  %v512 = vpow.pop %v511
  %v513 = vmul.f32 %v387, 1.442695
  %v514 = vpow.pop %v513
  %v515 = vmul.f32 %v243, 1.442695
  %v516 = vpow.pop %v515
  %v517 = vmul.f32 %v292, 1.442695
  %v518 = vpow.pop %v517
  %v519 = vmul.f32 %v341, 1.442695
  %v520 = vpow.pop %v519
  %v521 = vmul.f32 %v390, 1.442695
  %v522 = vpow.pop %v521
  %v523 = vmul.f32 %v245, 1.442695
  %v524 = vpow.pop %v523
  %v525 = vmul.f32 %v294, 1.442695
  %v526 = vpow.pop %v525
  %v527 = vmul.f32 %v343, 1.442695
  %v528 = vpow.pop %v527
  %v529 = vmul.f32 %v392, 1.442695
  %v530 = vpow.pop %v529
  %v531 = vmul.f32 %v248, 1.442695
  %v532 = vpow.pop %v531
  %v533 = vmul.f32 %v297, 1.442695
  %v534 = vpow.pop %v533
  %v535 = vmul.f32 %v346, 1.442695
  %v536 = vpow.pop %v535
  %v537 = vmul.f32 %v395, 1.442695
  %v538 = vpow.pop %v537
  %v539 = vmul.f32 %v250, 1.442695
  %v540 = vpow.pop %v539
  %v541 = vmul.f32 %v299, 1.442695
  %v542 = vpow.pop %v541
  %v543 = vmul.f32 %v348, 1.442695
  %v544 = vpow.pop %v543
  %v545 = vmul.f32 %v397, 1.442695
  %v546 = vpow.pop %v545
  %v547 = vmul.f32 %v253, 1.442695
  %v548 = vpow.pop %v547
  %v549 = vmul.f32 %v302, 1.442695
  %v550 = vpow.pop %v549
  %v551 = vmul.f32 %v351, 1.442695
  %v552 = vpow.pop %v551
  %v553 = vmul.f32 %v400, 1.442695
  %v554 = vpow.pop %v553
  %v555 = vmul.f32 %v255, 1.442695
  %v556 = vpow.pop %v555
  %v557 = vmul.f32 %v304, 1.442695
  %v558 = vpow.pop %v557
  %v559 = vmul.f32 %v353, 1.442695
  %v560 = vpow.pop %v559
  %v561 = vmul.f32 %v402, 1.442695
  %v562 = vpow.pop %v561
  %v563 = vmul.f32 %v258, 1.442695
  %v564 = vpow.pop %v563
  %v565 = vmul.f32 %v307, 1.442695
  %v566 = vpow.pop %v565
  %v567 = vmul.f32 %v356, 1.442695
  %v568 = vpow.pop %v567
  %v569 = vmul.f32 %v405, 1.442695
  %v570 = vpow.pop %v569
  %v571 = vmul.f32 %v260, 1.442695
  %v572 = vpow.pop %v571
  %v573 = vmul.f32 %v309, 1.442695
  %v574 = vpow.pop %v573
  %v575 = vmul.f32 %v358, 1.442695
  %v576 = vpow.pop %v575
  %v577 = vmul.f32 %v407, 1.442695
  %v578 = vpow.pop %v577
  %v579 = vmul.f32 %v263, 1.442695
  %v580 = vpow.pop %v579
  %v581 = vmul.f32 %v312, 1.442695
  %v582 = vpow.pop %v581
  %v583 = vmul.f32 %v361, 1.442695
  %v584 = vpow.pop %v583
  %v585 = vmul.f32 %v410, 1.442695
  %v586 = vpow.pop %v585
  %v587 = vmul.f32 %v265, 1.442695
  %v588 = vpow.pop %v587
  %v589 = vmul.f32 %v314, 1.442695
  %v590 = vpow.pop %v589
  %v591 = vmul.f32 %v363, 1.442695
  %v592 = vpow.pop %v591
  %v593 = vmul.f32 %v412, 1.442695
  %v594 = vpow.pop %v593
  %v595 = vmul.f32 %v268, 1.442695
  %v596 = vpow.pop %v595
  %v597 = vmul.f32 %v317, 1.442695
  %v598 = vpow.pop %v597
  %v599 = vmul.f32 %v366, 1.442695
  %v600 = vpow.pop %v599
  %v601 = vmul.f32 %v415, 1.442695
  %v602 = vpow.pop %v601
  %v603 = vmul.f32 %v270, 1.442695
  %v604 = vpow.pop %v603
  %v605 = vmul.f32 %v319, 1.442695
  %v606 = vpow.pop %v605
  %v607 = vmul.f32 %v368, 1.442695
  %v608 = vpow.pop %v607
  %v609 = vmul.f32 %v417, 1.442695
  %v610 = vpow.pop %v609
  %v611 = vsub.f32 %v484, 1.0
  %v612 = vsub.f32 %v486, 1.0
  %v613 = vsub.f32 %v488, 1.0
  %v614 = vsub.f32 %v490, 1.0
  %v615 = vsub.f32 %v492, 1.0
  %v616 = vsub.f32 %v494, 1.0
  %v617 = vsub.f32 %v496, 1.0
  %v618 = vsub.f32 %v498, 1.0
  %v619 = vsub.f32 %v500, 1.0
  %v620 = vsub.f32 %v502, 1.0
  %v621 = vsub.f32 %v504, 1.0
  %v622 = vsub.f32 %v506, 1.0
  %v623 = vsub.f32 %v508, 1.0
  %v624 = vsub.f32 %v510, 1.0
  %v625 = vsub.f32 %v512, 1.0
  %v626 = vsub.f32 %v514, 1.0
  %v627 = vsub.f32 %v516, 1.0
  %v628 = vsub.f32 %v518, 1.0
  %v629 = vsub.f32 %v520, 1.0
  %v630 = vsub.f32 %v522, 1.0
  %v631 = vsub.f32 %v524, 1.0
  %v632 = vsub.f32 %v526, 1.0
  %v633 = vsub.f32 %v528, 1.0
  %v634 = vsub.f32 %v530, 1.0
  %v635 = vsub.f32 %v532, 1.0
  %v636 = vsub.f32 %v534, 1.0
  %v637 = vsub.f32 %v536, 1.0
  %v638 = vsub.f32 %v538, 1.0
  %v639 = vsub.f32 %v540, 1.0
  %v640 = vsub.f32 %v542, 1.0
  %v641 = vsub.f32 %v544, 1.0
  %v642 = vsub.f32 %v546, 1.0
  %v643 = vsub.f32 %v548, 1.0
  %v644 = vsub.f32 %v550, 1.0
  %v645 = vsub.f32 %v552, 1.0
  %v646 = vsub.f32 %v554, 1.0
  %v647 = vsub.f32 %v556, 1.0
  %v648 = vsub.f32 %v558, 1.0
  %v649 = vsub.f32 %v560, 1.0
  %v650 = vsub.f32 %v562, 1.0
  %v651 = vsub.f32 %v564, 1.0
  %v652 = vsub.f32 %v566, 1.0
  %v653 = vsub.f32 %v568, 1.0
  %v654 = vsub.f32 %v570, 1.0
  %v655 = vsub.f32 %v572, 1.0
  %v656 = vsub.f32 %v574, 1.0
  %v657 = vsub.f32 %v576, 1.0
  %v658 = vsub.f32 %v578, 1.0
  %v659 = vsub.f32 %v580, 1.0
  %v660 = vsub.f32 %v582, 1.0
  %v661 = vsub.f32 %v584, 1.0
  %v662 = vsub.f32 %v586, 1.0
  %v663 = vsub.f32 %v588, 1.0
  %v664 = vsub.f32 %v590, 1.0
  %v665 = vsub.f32 %v592, 1.0
  %v666 = vsub.f32 %v594, 1.0
  %v667 = vsub.f32 %v596, 1.0
  %v668 = vsub.f32 %v598, 1.0
  %v669 = vsub.f32 %v600, 1.0
  %v670 = vsub.f32 %v602, 1.0
  %v671 = vsub.f32 %v604, 1.0
  %v672 = vsub.f32 %v606, 1.0
  %v673 = vsub.f32 %v608, 1.0
  %v674 = vsub.f32 %v610, 1.0
  %v675 = vsel %vm419, %v233, %v611
  %v676 = vsel %vm420, %v282, %v612
  %v677 = vsel %vm421, %v331, %v613
  %v678 = vsel %vm422, %v380, %v614
  %v679 = vsel %vm423, %v235, %v615
  %v680 = vsel %vm424, %v284, %v616
  %v681 = vsel %vm425, %v333, %v617
  %v682 = vsel %vm426, %v382, %v618
  %v683 = vsel %vm427, %v238, %v619
  %v684 = vsel %vm428, %v287, %v620
  %v685 = vsel %vm429, %v336, %v621
  %v686 = vsel %vm430, %v385, %v622
  %v687 = vsel %vm431, %v240, %v623
  %v688 = vsel %vm432, %v289, %v624
  %v689 = vsel %vm433, %v338, %v625
  %v690 = vsel %vm434, %v387, %v626
  %v691 = vsel %vm435, %v243, %v627
  %v692 = vsel %vm436, %v292, %v628
  %v693 = vsel %vm437, %v341, %v629
  %v694 = vsel %vm438, %v390, %v630
  %v695 = vsel %vm439, %v245, %v631
  %v696 = vsel %vm440, %v294, %v632
  %v697 = vsel %vm441, %v343, %v633
  %v698 = vsel %vm442, %v392, %v634
  %v699 = vsel %vm443, %v248, %v635
  %v700 = vsel %vm444, %v297, %v636
  %v701 = vsel %vm445, %v346, %v637
  %v702 = vsel %vm446, %v395, %v638
  %v703 = vsel %vm447, %v250, %v639
  %v704 = vsel %vm448, %v299, %v640
  %v705 = vsel %vm449, %v348, %v641
  %v706 = vsel %vm450, %v397, %v642
  %v707 = vsel %vm451, %v253, %v643
  %v708 = vsel %vm452, %v302, %v644
  %v709 = vsel %vm453, %v351, %v645
  %v710 = vsel %vm454, %v400, %v646
  %v711 = vsel %vm455, %v255, %v647
  %v712 = vsel %vm456, %v304, %v648
  %v713 = vsel %vm457, %v353, %v649
  %v714 = vsel %vm458, %v402, %v650
  %v715 = vsel %vm459, %v258, %v651
  %v716 = vsel %vm460, %v307, %v652
  %v717 = vsel %vm461, %v356, %v653
  %v718 = vsel %vm462, %v405, %v654
  %v719 = vsel %vm463, %v260, %v655
  %v720 = vsel %vm464, %v309, %v656
  %v721 = vsel %vm465, %v358, %v657
  %v722 = vsel %vm466, %v407, %v658
  %v723 = vsel %vm467, %v263, %v659
  %v724 = vsel %vm468, %v312, %v660
  %v725 = vsel %vm469, %v361, %v661
  %v726 = vsel %vm470, %v410, %v662
  %v727 = vsel %vm471, %v265, %v663
  %v728 = vsel %vm472, %v314, %v664
  %v729 = vsel %vm473, %v363, %v665
  %v730 = vsel %vm474, %v412, %v666
  %v731 = vsel %vm475, %v268, %v667
  %v732 = vsel %vm476, %v317, %v668
  %v733 = vsel %vm477, %v366, %v669
  %v734 = vsel %vm478, %v415, %v670
  %v735 = vsel %vm479, %v270, %v671
  %v736 = vsel %vm480, %v319, %v672
  %v737 = vsel %vm481, %v368, %v673
  %v738 = vsel %vm482, %v417, %v674
  %v739 = vld [vmem:[%s2] sm:$0xf]
  %v740 = vld [vmem:[%s2 + $0x4] sm:$0xf]
  %v741 = vld [vmem:[%s2 + $0x8] sm:$0xf]
  %v742 = vld [vmem:[%s2 + $0xc] sm:$0xf]
  %v743 = vld [vmem:[%s2 + $0x10] sm:$0xf]
  %v744 = vld [vmem:[%s2 + $0x14] sm:$0xf]
  %v745 = vld [vmem:[%s2 + $0x18] sm:$0xf]
  %v746 = vld [vmem:[%s2 + $0x1c] sm:$0xf]
  %v747 = vld [vmem:[%s2 + $0x20] sm:$0xf]
  %v748 = vld [vmem:[%s2 + $0x24] sm:$0xf]
  %v749 = vld [vmem:[%s2 + $0x28] sm:$0xf]
  %v750 = vld [vmem:[%s2 + $0x2c] sm:$0xf]
  %v751 = vld [vmem:[%s2 + $0x30] sm:$0xf]
  %v752 = vld [vmem:[%s2 + $0x34] sm:$0xf]
  %v753 = vld [vmem:[%s2 + $0x38] sm:$0xf]
  %v754 = vld [vmem:[%s2 + $0x3c] sm:$0xf]
  %v755 = vpack.c.bf16 %v679, %v675
  %v756 = vpack.c.bf16 %v680, %v676
  %v757 = vpack.c.bf16 %v681, %v677
  %v758 = vpack.c.bf16 %v682, %v678
  %v759 = vpack.c.bf16 %v687, %v683
  %v760 = vpack.c.bf16 %v688, %v684
  %v761 = vpack.c.bf16 %v689, %v685
  %v762 = vpack.c.bf16 %v690, %v686
  %v763 = vpack.c.bf16 %v695, %v691
  %v764 = vpack.c.bf16 %v696, %v692
  %v765 = vpack.c.bf16 %v697, %v693
  %v766 = vpack.c.bf16 %v698, %v694
  %v767 = vpack.c.bf16 %v703, %v699
  %v768 = vpack.c.bf16 %v704, %v700
  %v769 = vpack.c.bf16 %v705, %v701
  %v770 = vpack.c.bf16 %v706, %v702
  %v771 = vpack.c.bf16 %v711, %v707
  %v772 = vpack.c.bf16 %v712, %v708
  %v773 = vpack.c.bf16 %v713, %v709
  %v774 = vpack.c.bf16 %v714, %v710
  %v775 = vpack.c.bf16 %v719, %v715
  %v776 = vpack.c.bf16 %v720, %v716
  %v777 = vpack.c.bf16 %v721, %v717
  %v778 = vpack.c.bf16 %v722, %v718
  %v779 = vpack.c.bf16 %v727, %v723
  %v780 = vpack.c.bf16 %v728, %v724
  %v781 = vpack.c.bf16 %v729, %v725
  %v782 = vpack.c.bf16 %v730, %v726
  %v783 = vpack.c.bf16 %v735, %v731
  %v784 = vpack.c.bf16 %v736, %v732
  %v785 = vpack.c.bf16 %v737, %v733
  %v786 = vpack.c.bf16 %v738, %v734
  %s787 = scalar_lea.vmem %s4, 128
  %v788 = vld [vmem:[%s787] sm:$0xff]
  %v789 = vld [vmem:[%s787 + $0x8] sm:$0xff]
  %v790 = vld [vmem:[%s787 + $0x10] sm:$0xff]
  %v791 = vld [vmem:[%s787 + $0x18] sm:$0xff]
  %v792 = vld [vmem:[%s787 + $0x20] sm:$0xff]
  %v793 = vld [vmem:[%s787 + $0x28] sm:$0xff]
  %v794 = vld [vmem:[%s787 + $0x30] sm:$0xff]
  %v795 = vld [vmem:[%s787 + $0x38] sm:$0xff]
  %v796 = vld [vmem:[%s787 + $0x40] sm:$0xff]
  %v797 = vld [vmem:[%s787 + $0x48] sm:$0xff]
  %v798 = vld [vmem:[%s787 + $0x50] sm:$0xff]
  %v799 = vld [vmem:[%s787 + $0x58] sm:$0xff]
  %v800 = vld [vmem:[%s787 + $0x60] sm:$0xff]
  %v801 = vld [vmem:[%s787 + $0x68] sm:$0xff]
  %v802 = vld [vmem:[%s787 + $0x70] sm:$0xff]
  %v803 = vld [vmem:[%s787 + $0x78] sm:$0xff]
  %805 = vset.pattern.permute.xlu0 0
  %806 = vperm.xlu0 %805, %v788
  %v807 = vpop.permute.xlu0 %806
  %810 = vset.pattern.permute.xlu0 0
  %811 = vperm.xlu0 %810, %v789
  %v812 = vpop.permute.xlu0 %811
  %815 = vset.pattern.permute.xlu0 0
  %816 = vperm.xlu0 %815, %v790
  %v817 = vpop.permute.xlu0 %816
  %820 = vset.pattern.permute.xlu0 0
  %821 = vperm.xlu0 %820, %v791
  %v822 = vpop.permute.xlu0 %821
  %825 = vset.pattern.permute.xlu0 0
  %826 = vperm.xlu0 %825, %v792
  %v827 = vpop.permute.xlu0 %826
  %830 = vset.pattern.permute.xlu0 0
  %831 = vperm.xlu0 %830, %v793
  %v832 = vpop.permute.xlu0 %831
  %835 = vset.pattern.permute.xlu0 0
  %836 = vperm.xlu0 %835, %v794
  %v837 = vpop.permute.xlu0 %836
  %840 = vset.pattern.permute.xlu0 0
  %841 = vperm.xlu0 %840, %v795
  %v842 = vpop.permute.xlu0 %841
  %845 = vset.pattern.permute.xlu0 0
  %846 = vperm.xlu0 %845, %v796
  %v847 = vpop.permute.xlu0 %846
  %850 = vset.pattern.permute.xlu0 0
  %851 = vperm.xlu0 %850, %v797
  %v852 = vpop.permute.xlu0 %851
  %855 = vset.pattern.permute.xlu0 0
  %856 = vperm.xlu0 %855, %v798
  %v857 = vpop.permute.xlu0 %856
  %860 = vset.pattern.permute.xlu0 0
  %861 = vperm.xlu0 %860, %v799
  %v862 = vpop.permute.xlu0 %861
  %865 = vset.pattern.permute.xlu0 0
  %866 = vperm.xlu0 %865, %v800
  %v867 = vpop.permute.xlu0 %866
  %870 = vset.pattern.permute.xlu0 0
  %871 = vperm.xlu0 %870, %v801
  %v872 = vpop.permute.xlu0 %871
  %875 = vset.pattern.permute.xlu0 0
  %876 = vperm.xlu0 %875, %v802
  %v877 = vpop.permute.xlu0 %876
  %880 = vset.pattern.permute.xlu0 0
  %881 = vperm.xlu0 %880, %v803
  %v882 = vpop.permute.xlu0 %881
  %v900 = vunpack.c.l.b16 %v739
  %v901 = vunpack.c.l.b16 %v740
  %v902 = vunpack.c.l.b16 %v741
  %v903 = vunpack.c.l.b16 %v742
  %v904 = vunpack.c.l.b16 %v743
  %v905 = vunpack.c.l.b16 %v744
  %v906 = vunpack.c.l.b16 %v745
  %v907 = vunpack.c.l.b16 %v746
  %v908 = vunpack.c.l.b16 %v747
  %v909 = vunpack.c.l.b16 %v748
  %v910 = vunpack.c.l.b16 %v749
  %v911 = vunpack.c.l.b16 %v750
  %v912 = vunpack.c.l.b16 %v751
  %v913 = vunpack.c.l.b16 %v752
  %v914 = vunpack.c.l.b16 %v753
  %v915 = vunpack.c.l.b16 %v754
  %v916 = vpack.c.b16 %v901, %v900
  %v917 = vpack.c.b16 %v903, %v902
  %v918 = vpack.c.b16 %v905, %v904
  %v919 = vpack.c.b16 %v907, %v906
  %v920 = vpack.c.b16 %v909, %v908
  %v921 = vpack.c.b16 %v911, %v910
  %v922 = vpack.c.b16 %v913, %v912
  %v923 = vpack.c.b16 %v915, %v914
  %932 = vmatpush.bf16.msra.mxu0 %v783
  %933 = vmatpush.bf16.msra.mxu0 %v779
  %934 = vmatpush.bf16.msra.mxu0 %v775
  %935 = vmatpush.bf16.msra.mxu0 %v771
  %936 = vmatpush.bf16.msra.mxu0 %v767
  %937 = vmatpush.bf16.msra.mxu0 %v763
  %938 = vmatpush.bf16.msra.mxu0 %v759
  %939 = vmatpush.bf16.msra.mxu0 %v755
  %940 = vmatmul.bf16.gmra.mxu0 %v916
  %v941 = vpop.f32.mrf.mxu0
  %v942 = vadd.f32 %v807, %v941
  %v943 = vpop.f32.mrf.mxu0
  %v944 = vadd.f32 %v812, %v943
  %945 = vmatmul.bf16.gmra.mxu0 %v917
  %v946 = vpop.f32.mrf.mxu0
  %v947 = vadd.f32 %v817, %v946
  %v948 = vpop.f32.mrf.mxu0
  %v949 = vadd.f32 %v822, %v948
  %950 = vmatmul.bf16.gmra.mxu0 %v918
  %v951 = vpop.f32.mrf.mxu0
  %v952 = vadd.f32 %v827, %v951
  %v953 = vpop.f32.mrf.mxu0
  %v954 = vadd.f32 %v832, %v953
  %955 = vmatmul.bf16.gmra.mxu0 %v919
  %v956 = vpop.f32.mrf.mxu0
  %v957 = vadd.f32 %v837, %v956
  %v958 = vpop.f32.mrf.mxu0
  %v959 = vadd.f32 %v842, %v958
  %960 = vmatmul.bf16.gmra.mxu0 %v920
  %v961 = vpop.f32.mrf.mxu0
  %v962 = vadd.f32 %v847, %v961
  %v963 = vpop.f32.mrf.mxu0
  %v964 = vadd.f32 %v852, %v963
  %965 = vmatmul.bf16.gmra.mxu0 %v921
  %v966 = vpop.f32.mrf.mxu0
  %v967 = vadd.f32 %v857, %v966
  %v968 = vpop.f32.mrf.mxu0
  %v969 = vadd.f32 %v862, %v968
  %970 = vmatmul.bf16.gmra.mxu0 %v922
  %v971 = vpop.f32.mrf.mxu0
  %v972 = vadd.f32 %v867, %v971
  %v973 = vpop.f32.mrf.mxu0
  %v974 = vadd.f32 %v872, %v973
  %975 = vmatmul.bf16.gmra.mxu0 %v923
  %v976 = vpop.f32.mrf.mxu0
  %v977 = vadd.f32 %v877, %v976
  %v978 = vpop.f32.mrf.mxu0
  %v979 = vadd.f32 %v882, %v978
  %980 = vdwg.mxu0
  %981 = vmatpush.bf16.msra.mxu0 %v784
  %982 = vmatpush.bf16.msra.mxu0 %v780
  %983 = vmatpush.bf16.msra.mxu0 %v776
  %984 = vmatpush.bf16.msra.mxu0 %v772
  %985 = vmatpush.bf16.msra.mxu0 %v768
  %986 = vmatpush.bf16.msra.mxu0 %v764
  %987 = vmatpush.bf16.msra.mxu0 %v760
  %988 = vmatpush.bf16.msra.mxu0 %v756
  %989 = vmatmul.bf16.gmra.mxu0 %v916
  %v990 = vpop.f32.mrf.mxu0
  %v991 = vadd.f32 %v807, %v990
  %v992 = vpop.f32.mrf.mxu0
  %v993 = vadd.f32 %v812, %v992
  %994 = vmatmul.bf16.gmra.mxu0 %v917
  %v995 = vpop.f32.mrf.mxu0
  %v996 = vadd.f32 %v817, %v995
  %v997 = vpop.f32.mrf.mxu0
  %v998 = vadd.f32 %v822, %v997
  %999 = vmatmul.bf16.gmra.mxu0 %v918
  %v1000 = vpop.f32.mrf.mxu0
  %v1001 = vadd.f32 %v827, %v1000
  %v1002 = vpop.f32.mrf.mxu0
  %v1003 = vadd.f32 %v832, %v1002
  %1004 = vmatmul.bf16.gmra.mxu0 %v919
  %v1005 = vpop.f32.mrf.mxu0
  %v1006 = vadd.f32 %v837, %v1005
  %v1007 = vpop.f32.mrf.mxu0
  %v1008 = vadd.f32 %v842, %v1007
  %1009 = vmatmul.bf16.gmra.mxu0 %v920
  %v1010 = vpop.f32.mrf.mxu0
  %v1011 = vadd.f32 %v847, %v1010
  %v1012 = vpop.f32.mrf.mxu0
  %v1013 = vadd.f32 %v852, %v1012
  %1014 = vmatmul.bf16.gmra.mxu0 %v921
  %v1015 = vpop.f32.mrf.mxu0
  %v1016 = vadd.f32 %v857, %v1015
  %v1017 = vpop.f32.mrf.mxu0
  %v1018 = vadd.f32 %v862, %v1017
  %1019 = vmatmul.bf16.gmra.mxu0 %v922
  %v1020 = vpop.f32.mrf.mxu0
  %v1021 = vadd.f32 %v867, %v1020
  %v1022 = vpop.f32.mrf.mxu0
  %v1023 = vadd.f32 %v872, %v1022
  %1024 = vmatmul.bf16.gmra.mxu0 %v923
  %v1025 = vpop.f32.mrf.mxu0
  %v1026 = vadd.f32 %v877, %v1025
  %v1027 = vpop.f32.mrf.mxu0
  %v1028 = vadd.f32 %v882, %v1027
  %1029 = vdwg.mxu0
  %1030 = vmatpush.bf16.msra.mxu0 %v785
  %1031 = vmatpush.bf16.msra.mxu0 %v781
  %1032 = vmatpush.bf16.msra.mxu0 %v777
  %1033 = vmatpush.bf16.msra.mxu0 %v773
  %1034 = vmatpush.bf16.msra.mxu0 %v769
  %1035 = vmatpush.bf16.msra.mxu0 %v765
  %1036 = vmatpush.bf16.msra.mxu0 %v761
  %1037 = vmatpush.bf16.msra.mxu0 %v757
  %1038 = vmatmul.bf16.gmra.mxu0 %v916
  %v1039 = vpop.f32.mrf.mxu0
  %v1040 = vadd.f32 %v807, %v1039
  %v1041 = vpop.f32.mrf.mxu0
  %v1042 = vadd.f32 %v812, %v1041
  %1043 = vmatmul.bf16.gmra.mxu0 %v917
  %v1044 = vpop.f32.mrf.mxu0
  %v1045 = vadd.f32 %v817, %v1044
  %v1046 = vpop.f32.mrf.mxu0
  %v1047 = vadd.f32 %v822, %v1046
  %1048 = vmatmul.bf16.gmra.mxu0 %v918
  %v1049 = vpop.f32.mrf.mxu0
  %v1050 = vadd.f32 %v827, %v1049
  %v1051 = vpop.f32.mrf.mxu0
  %v1052 = vadd.f32 %v832, %v1051
  %1053 = vmatmul.bf16.gmra.mxu0 %v919
  %v1054 = vpop.f32.mrf.mxu0
  %v1055 = vadd.f32 %v837, %v1054
  %v1056 = vpop.f32.mrf.mxu0
  %v1057 = vadd.f32 %v842, %v1056
  %1058 = vmatmul.bf16.gmra.mxu0 %v920
  %v1059 = vpop.f32.mrf.mxu0
  %v1060 = vadd.f32 %v847, %v1059
  %v1061 = vpop.f32.mrf.mxu0
  %v1062 = vadd.f32 %v852, %v1061
  %1063 = vmatmul.bf16.gmra.mxu0 %v921
  %v1064 = vpop.f32.mrf.mxu0
  %v1065 = vadd.f32 %v857, %v1064
  %v1066 = vpop.f32.mrf.mxu0
  %v1067 = vadd.f32 %v862, %v1066
  %1068 = vmatmul.bf16.gmra.mxu0 %v922
  %v1069 = vpop.f32.mrf.mxu0
  %v1070 = vadd.f32 %v867, %v1069
  %v1071 = vpop.f32.mrf.mxu0
  %v1072 = vadd.f32 %v872, %v1071
  %1073 = vmatmul.bf16.gmra.mxu0 %v923
  %v1074 = vpop.f32.mrf.mxu0
  %v1075 = vadd.f32 %v877, %v1074
  %v1076 = vpop.f32.mrf.mxu0
  %v1077 = vadd.f32 %v882, %v1076
  %1078 = vdwg.mxu0
  %1079 = vmatpush.bf16.msra.mxu0 %v786
  %1080 = vmatpush.bf16.msra.mxu0 %v782
  %1081 = vmatpush.bf16.msra.mxu0 %v778
  %1082 = vmatpush.bf16.msra.mxu0 %v774
  %1083 = vmatpush.bf16.msra.mxu0 %v770
  %1084 = vmatpush.bf16.msra.mxu0 %v766
  %1085 = vmatpush.bf16.msra.mxu0 %v762
  %1086 = vmatpush.bf16.msra.mxu0 %v758
  %1087 = vmatmul.bf16.gmra.mxu0 %v916
  %v1088 = vpop.f32.mrf.mxu0
  %v1089 = vadd.f32 %v807, %v1088
  %v1090 = vpop.f32.mrf.mxu0
  %v1091 = vadd.f32 %v812, %v1090
  %1092 = vmatmul.bf16.gmra.mxu0 %v917
  %v1093 = vpop.f32.mrf.mxu0
  %v1094 = vadd.f32 %v817, %v1093
  %v1095 = vpop.f32.mrf.mxu0
  %v1096 = vadd.f32 %v822, %v1095
  %1097 = vmatmul.bf16.gmra.mxu0 %v918
  %v1098 = vpop.f32.mrf.mxu0
  %v1099 = vadd.f32 %v827, %v1098
  %v1100 = vpop.f32.mrf.mxu0
  %v1101 = vadd.f32 %v832, %v1100
  %1102 = vmatmul.bf16.gmra.mxu0 %v919
  %v1103 = vpop.f32.mrf.mxu0
  %v1104 = vadd.f32 %v837, %v1103
  %v1105 = vpop.f32.mrf.mxu0
  %v1106 = vadd.f32 %v842, %v1105
  %1107 = vmatmul.bf16.gmra.mxu0 %v920
  %v1108 = vpop.f32.mrf.mxu0
  %v1109 = vadd.f32 %v847, %v1108
  %v1110 = vpop.f32.mrf.mxu0
  %v1111 = vadd.f32 %v852, %v1110
  %1112 = vmatmul.bf16.gmra.mxu0 %v921
  %v1113 = vpop.f32.mrf.mxu0
  %v1114 = vadd.f32 %v857, %v1113
  %v1115 = vpop.f32.mrf.mxu0
  %v1116 = vadd.f32 %v862, %v1115
  %1117 = vmatmul.bf16.gmra.mxu0 %v922
  %v1118 = vpop.f32.mrf.mxu0
  %v1119 = vadd.f32 %v867, %v1118
  %v1120 = vpop.f32.mrf.mxu0
  %v1121 = vadd.f32 %v872, %v1120
  %1122 = vmatmul.bf16.gmra.mxu0 %v923
  %v1123 = vpop.f32.mrf.mxu0
  %v1124 = vadd.f32 %v877, %v1123
  %v1125 = vpop.f32.mrf.mxu0
  %v1126 = vadd.f32 %v882, %v1125
  %1127 = vdwg.mxu0
  %vm1128 = vcmp.gt.f32.partialorder %v942, 0.0
  %vm1129 = vcmp.gt.f32.partialorder %v991, 0.0
  %vm1130 = vcmp.gt.f32.partialorder %v1040, 0.0
  %vm1131 = vcmp.gt.f32.partialorder %v1089, 0.0
  %vm1132 = vcmp.gt.f32.partialorder %v944, 0.0
  %vm1133 = vcmp.gt.f32.partialorder %v993, 0.0
  %vm1134 = vcmp.gt.f32.partialorder %v1042, 0.0
  %vm1135 = vcmp.gt.f32.partialorder %v1091, 0.0
  %vm1136 = vcmp.gt.f32.partialorder %v947, 0.0
  %vm1137 = vcmp.gt.f32.partialorder %v996, 0.0
  %vm1138 = vcmp.gt.f32.partialorder %v1045, 0.0
  %vm1139 = vcmp.gt.f32.partialorder %v1094, 0.0
  %vm1140 = vcmp.gt.f32.partialorder %v949, 0.0
  %vm1141 = vcmp.gt.f32.partialorder %v998, 0.0
  %vm1142 = vcmp.gt.f32.partialorder %v1047, 0.0
  %vm1143 = vcmp.gt.f32.partialorder %v1096, 0.0
  %vm1144 = vcmp.gt.f32.partialorder %v952, 0.0
  %vm1145 = vcmp.gt.f32.partialorder %v1001, 0.0
  %vm1146 = vcmp.gt.f32.partialorder %v1050, 0.0
  %vm1147 = vcmp.gt.f32.partialorder %v1099, 0.0
  %vm1148 = vcmp.gt.f32.partialorder %v954, 0.0
  %vm1149 = vcmp.gt.f32.partialorder %v1003, 0.0
  %vm1150 = vcmp.gt.f32.partialorder %v1052, 0.0
  %vm1151 = vcmp.gt.f32.partialorder %v1101, 0.0
  %vm1152 = vcmp.gt.f32.partialorder %v957, 0.0
  %vm1153 = vcmp.gt.f32.partialorder %v1006, 0.0
  %vm1154 = vcmp.gt.f32.partialorder %v1055, 0.0
  %vm1155 = vcmp.gt.f32.partialorder %v1104, 0.0
  %vm1156 = vcmp.gt.f32.partialorder %v959, 0.0
  %vm1157 = vcmp.gt.f32.partialorder %v1008, 0.0
  %vm1158 = vcmp.gt.f32.partialorder %v1057, 0.0
  %vm1159 = vcmp.gt.f32.partialorder %v1106, 0.0
  %vm1160 = vcmp.gt.f32.partialorder %v962, 0.0
  %vm1161 = vcmp.gt.f32.partialorder %v1011, 0.0
  %vm1162 = vcmp.gt.f32.partialorder %v1060, 0.0
  %vm1163 = vcmp.gt.f32.partialorder %v1109, 0.0
  %vm1164 = vcmp.gt.f32.partialorder %v964, 0.0
  %vm1165 = vcmp.gt.f32.partialorder %v1013, 0.0
  %vm1166 = vcmp.gt.f32.partialorder %v1062, 0.0
  %vm1167 = vcmp.gt.f32.partialorder %v1111, 0.0
  %vm1168 = vcmp.gt.f32.partialorder %v967, 0.0
  %vm1169 = vcmp.gt.f32.partialorder %v1016, 0.0
  %vm1170 = vcmp.gt.f32.partialorder %v1065, 0.0
  %vm1171 = vcmp.gt.f32.partialorder %v1114, 0.0
  %vm1172 = vcmp.gt.f32.partialorder %v969, 0.0
  %vm1173 = vcmp.gt.f32.partialorder %v1018, 0.0
  %vm1174 = vcmp.gt.f32.partialorder %v1067, 0.0
  %vm1175 = vcmp.gt.f32.partialorder %v1116, 0.0
  %vm1176 = vcmp.gt.f32.partialorder %v972, 0.0
  %vm1177 = vcmp.gt.f32.partialorder %v1021, 0.0
  %vm1178 = vcmp.gt.f32.partialorder %v1070, 0.0
  %vm1179 = vcmp.gt.f32.partialorder %v1119, 0.0
  %vm1180 = vcmp.gt.f32.partialorder %v974, 0.0
  %vm1181 = vcmp.gt.f32.partialorder %v1023, 0.0
  %vm1182 = vcmp.gt.f32.partialorder %v1072, 0.0
  %vm1183 = vcmp.gt.f32.partialorder %v1121, 0.0
  %vm1184 = vcmp.gt.f32.partialorder %v977, 0.0
  %vm1185 = vcmp.gt.f32.partialorder %v1026, 0.0
  %vm1186 = vcmp.gt.f32.partialorder %v1075, 0.0
  %vm1187 = vcmp.gt.f32.partialorder %v1124, 0.0
  %vm1188 = vcmp.gt.f32.partialorder %v979, 0.0
  %vm1189 = vcmp.gt.f32.partialorder %v1028, 0.0
  %vm1190 = vcmp.gt.f32.partialorder %v1077, 0.0
  %vm1191 = vcmp.gt.f32.partialorder %v1126, 0.0
  %v1192 = vmul.f32 %v942, 1.442695
  %v1193 = vpow.pop %v1192
  %v1194 = vmul.f32 %v991, 1.442695
  %v1195 = vpow.pop %v1194
  %v1196 = vmul.f32 %v1040, 1.442695
  %v1197 = vpow.pop %v1196
  %v1198 = vmul.f32 %v1089, 1.442695
  %v1199 = vpow.pop %v1198
  %v1200 = vmul.f32 %v944, 1.442695
  %v1201 = vpow.pop %v1200
  %v1202 = vmul.f32 %v993, 1.442695
  %v1203 = vpow.pop %v1202
  %v1204 = vmul.f32 %v1042, 1.442695
  %v1205 = vpow.pop %v1204
  %v1206 = vmul.f32 %v1091, 1.442695
  %v1207 = vpow.pop %v1206
  %v1208 = vmul.f32 %v947, 1.442695
  %v1209 = vpow.pop %v1208
  %v1210 = vmul.f32 %v996, 1.442695
  %v1211 = vpow.pop %v1210
  %v1212 = vmul.f32 %v1045, 1.442695
  %v1213 = vpow.pop %v1212
  %v1214 = vmul.f32 %v1094, 1.442695
  %v1215 = vpow.pop %v1214
  %v1216 = vmul.f32 %v949, 1.442695
  %v1217 = vpow.pop %v1216
  %v1218 = vmul.f32 %v998, 1.442695
  %v1219 = vpow.pop %v1218
  %v1220 = vmul.f32 %v1047, 1.442695
  %v1221 = vpow.pop %v1220
  %v1222 = vmul.f32 %v1096, 1.442695
  %v1223 = vpow.pop %v1222
  %v1224 = vmul.f32 %v952, 1.442695
  %v1225 = vpow.pop %v1224
  %v1226 = vmul.f32 %v1001, 1.442695
  %v1227 = vpow.pop %v1226
  %v1228 = vmul.f32 %v1050, 1.442695
  %v1229 = vpow.pop %v1228
  %v1230 = vmul.f32 %v1099, 1.442695
  %v1231 = vpow.pop %v1230
  %v1232 = vmul.f32 %v954, 1.442695
  %v1233 = vpow.pop %v1232
  %v1234 = vmul.f32 %v1003, 1.442695
  %v1235 = vpow.pop %v1234
  %v1236 = vmul.f32 %v1052, 1.442695
  %v1237 = vpow.pop %v1236
  %v1238 = vmul.f32 %v1101, 1.442695
  %v1239 = vpow.pop %v1238
  %v1240 = vmul.f32 %v957, 1.442695
  %v1241 = vpow.pop %v1240
  %v1242 = vmul.f32 %v1006, 1.442695
  %v1243 = vpow.pop %v1242
  %v1244 = vmul.f32 %v1055, 1.442695
  %v1245 = vpow.pop %v1244
  %v1246 = vmul.f32 %v1104, 1.442695
  %v1247 = vpow.pop %v1246
  %v1248 = vmul.f32 %v959, 1.442695
  %v1249 = vpow.pop %v1248
  %v1250 = vmul.f32 %v1008, 1.442695
  %v1251 = vpow.pop %v1250
  %v1252 = vmul.f32 %v1057, 1.442695
  %v1253 = vpow.pop %v1252
  %v1254 = vmul.f32 %v1106, 1.442695
  %v1255 = vpow.pop %v1254
  %v1256 = vmul.f32 %v962, 1.442695
  %v1257 = vpow.pop %v1256
  %v1258 = vmul.f32 %v1011, 1.442695
  %v1259 = vpow.pop %v1258
  %v1260 = vmul.f32 %v1060, 1.442695
  %v1261 = vpow.pop %v1260
  %v1262 = vmul.f32 %v1109, 1.442695
  %v1263 = vpow.pop %v1262
  %v1264 = vmul.f32 %v964, 1.442695
  %v1265 = vpow.pop %v1264
  %v1266 = vmul.f32 %v1013, 1.442695
  %v1267 = vpow.pop %v1266
  %v1268 = vmul.f32 %v1062, 1.442695
  %v1269 = vpow.pop %v1268
  %v1270 = vmul.f32 %v1111, 1.442695
  %v1271 = vpow.pop %v1270
  %v1272 = vmul.f32 %v967, 1.442695
  %v1273 = vpow.pop %v1272
  %v1274 = vmul.f32 %v1016, 1.442695
  %v1275 = vpow.pop %v1274
  %v1276 = vmul.f32 %v1065, 1.442695
  %v1277 = vpow.pop %v1276
  %v1278 = vmul.f32 %v1114, 1.442695
  %v1279 = vpow.pop %v1278
  %v1280 = vmul.f32 %v969, 1.442695
  %v1281 = vpow.pop %v1280
  %v1282 = vmul.f32 %v1018, 1.442695
  %v1283 = vpow.pop %v1282
  %v1284 = vmul.f32 %v1067, 1.442695
  %v1285 = vpow.pop %v1284
  %v1286 = vmul.f32 %v1116, 1.442695
  %v1287 = vpow.pop %v1286
  %v1288 = vmul.f32 %v972, 1.442695
  %v1289 = vpow.pop %v1288
  %v1290 = vmul.f32 %v1021, 1.442695
  %v1291 = vpow.pop %v1290
  %v1292 = vmul.f32 %v1070, 1.442695
  %v1293 = vpow.pop %v1292
  %v1294 = vmul.f32 %v1119, 1.442695
  %v1295 = vpow.pop %v1294
  %v1296 = vmul.f32 %v974, 1.442695
  %v1297 = vpow.pop %v1296
  %v1298 = vmul.f32 %v1023, 1.442695
  %v1299 = vpow.pop %v1298
  %v1300 = vmul.f32 %v1072, 1.442695
  %v1301 = vpow.pop %v1300
  %v1302 = vmul.f32 %v1121, 1.442695
  %v1303 = vpow.pop %v1302
  %v1304 = vmul.f32 %v977, 1.442695
  %v1305 = vpow.pop %v1304
  %v1306 = vmul.f32 %v1026, 1.442695
  %v1307 = vpow.pop %v1306
  %v1308 = vmul.f32 %v1075, 1.442695
  %v1309 = vpow.pop %v1308
  %v1310 = vmul.f32 %v1124, 1.442695
  %v1311 = vpow.pop %v1310
  %v1312 = vmul.f32 %v979, 1.442695
  %v1313 = vpow.pop %v1312
  %v1314 = vmul.f32 %v1028, 1.442695
  %v1315 = vpow.pop %v1314
  %v1316 = vmul.f32 %v1077, 1.442695
  %v1317 = vpow.pop %v1316
  %v1318 = vmul.f32 %v1126, 1.442695
  %v1319 = vpow.pop %v1318
  %v1320 = vsub.f32 %v1193, 1.0
  %v1321 = vsub.f32 %v1195, 1.0
  %v1322 = vsub.f32 %v1197, 1.0
  %v1323 = vsub.f32 %v1199, 1.0
  %v1324 = vsub.f32 %v1201, 1.0
  %v1325 = vsub.f32 %v1203, 1.0
  %v1326 = vsub.f32 %v1205, 1.0
  %v1327 = vsub.f32 %v1207, 1.0
  %v1328 = vsub.f32 %v1209, 1.0
  %v1329 = vsub.f32 %v1211, 1.0
  %v1330 = vsub.f32 %v1213, 1.0
  %v1331 = vsub.f32 %v1215, 1.0
  %v1332 = vsub.f32 %v1217, 1.0
  %v1333 = vsub.f32 %v1219, 1.0
  %v1334 = vsub.f32 %v1221, 1.0
  %v1335 = vsub.f32 %v1223, 1.0
  %v1336 = vsub.f32 %v1225, 1.0
  %v1337 = vsub.f32 %v1227, 1.0
  %v1338 = vsub.f32 %v1229, 1.0
  %v1339 = vsub.f32 %v1231, 1.0
  %v1340 = vsub.f32 %v1233, 1.0
  %v1341 = vsub.f32 %v1235, 1.0
  %v1342 = vsub.f32 %v1237, 1.0
  %v1343 = vsub.f32 %v1239, 1.0
  %v1344 = vsub.f32 %v1241, 1.0
  %v1345 = vsub.f32 %v1243, 1.0
  %v1346 = vsub.f32 %v1245, 1.0
  %v1347 = vsub.f32 %v1247, 1.0
  %v1348 = vsub.f32 %v1249, 1.0
  %v1349 = vsub.f32 %v1251, 1.0
  %v1350 = vsub.f32 %v1253, 1.0
  %v1351 = vsub.f32 %v1255, 1.0
  %v1352 = vsub.f32 %v1257, 1.0
  %v1353 = vsub.f32 %v1259, 1.0
  %v1354 = vsub.f32 %v1261, 1.0
  %v1355 = vsub.f32 %v1263, 1.0
  %v1356 = vsub.f32 %v1265, 1.0
  %v1357 = vsub.f32 %v1267, 1.0
  %v1358 = vsub.f32 %v1269, 1.0
  %v1359 = vsub.f32 %v1271, 1.0
  %v1360 = vsub.f32 %v1273, 1.0
  %v1361 = vsub.f32 %v1275, 1.0
  %v1362 = vsub.f32 %v1277, 1.0
  %v1363 = vsub.f32 %v1279, 1.0
  %v1364 = vsub.f32 %v1281, 1.0
  %v1365 = vsub.f32 %v1283, 1.0
  %v1366 = vsub.f32 %v1285, 1.0
  %v1367 = vsub.f32 %v1287, 1.0
  %v1368 = vsub.f32 %v1289, 1.0
  %v1369 = vsub.f32 %v1291, 1.0
  %v1370 = vsub.f32 %v1293, 1.0
  %v1371 = vsub.f32 %v1295, 1.0
  %v1372 = vsub.f32 %v1297, 1.0
  %v1373 = vsub.f32 %v1299, 1.0
  %v1374 = vsub.f32 %v1301, 1.0
  %v1375 = vsub.f32 %v1303, 1.0
  %v1376 = vsub.f32 %v1305, 1.0
  %v1377 = vsub.f32 %v1307, 1.0
  %v1378 = vsub.f32 %v1309, 1.0
  %v1379 = vsub.f32 %v1311, 1.0
  %v1380 = vsub.f32 %v1313, 1.0
  %v1381 = vsub.f32 %v1315, 1.0
  %v1382 = vsub.f32 %v1317, 1.0
  %v1383 = vsub.f32 %v1319, 1.0
  %v1384 = vsel %vm1128, %v942, %v1320
  %v1385 = vsel %vm1129, %v991, %v1321
  %v1386 = vsel %vm1130, %v1040, %v1322
  %v1387 = vsel %vm1131, %v1089, %v1323
  %v1388 = vsel %vm1132, %v944, %v1324
  %v1389 = vsel %vm1133, %v993, %v1325
  %v1390 = vsel %vm1134, %v1042, %v1326
  %v1391 = vsel %vm1135, %v1091, %v1327
  %v1392 = vsel %vm1136, %v947, %v1328
  %v1393 = vsel %vm1137, %v996, %v1329
  %v1394 = vsel %vm1138, %v1045, %v1330
  %v1395 = vsel %vm1139, %v1094, %v1331
  %v1396 = vsel %vm1140, %v949, %v1332
  %v1397 = vsel %vm1141, %v998, %v1333
  %v1398 = vsel %vm1142, %v1047, %v1334
  %v1399 = vsel %vm1143, %v1096, %v1335
  %v1400 = vsel %vm1144, %v952, %v1336
  %v1401 = vsel %vm1145, %v1001, %v1337
  %v1402 = vsel %vm1146, %v1050, %v1338
  %v1403 = vsel %vm1147, %v1099, %v1339
  %v1404 = vsel %vm1148, %v954, %v1340
  %v1405 = vsel %vm1149, %v1003, %v1341
  %v1406 = vsel %vm1150, %v1052, %v1342
  %v1407 = vsel %vm1151, %v1101, %v1343
  %v1408 = vsel %vm1152, %v957, %v1344
  %v1409 = vsel %vm1153, %v1006, %v1345
  %v1410 = vsel %vm1154, %v1055, %v1346
  %v1411 = vsel %vm1155, %v1104, %v1347
  %v1412 = vsel %vm1156, %v959, %v1348
  %v1413 = vsel %vm1157, %v1008, %v1349
  %v1414 = vsel %vm1158, %v1057, %v1350
  %v1415 = vsel %vm1159, %v1106, %v1351
  %v1416 = vsel %vm1160, %v962, %v1352
  %v1417 = vsel %vm1161, %v1011, %v1353
  %v1418 = vsel %vm1162, %v1060, %v1354
  %v1419 = vsel %vm1163, %v1109, %v1355
  %v1420 = vsel %vm1164, %v964, %v1356
  %v1421 = vsel %vm1165, %v1013, %v1357
  %v1422 = vsel %vm1166, %v1062, %v1358
  %v1423 = vsel %vm1167, %v1111, %v1359
  %v1424 = vsel %vm1168, %v967, %v1360
  %v1425 = vsel %vm1169, %v1016, %v1361
  %v1426 = vsel %vm1170, %v1065, %v1362
  %v1427 = vsel %vm1171, %v1114, %v1363
  %v1428 = vsel %vm1172, %v969, %v1364
  %v1429 = vsel %vm1173, %v1018, %v1365
  %v1430 = vsel %vm1174, %v1067, %v1366
  %v1431 = vsel %vm1175, %v1116, %v1367
  %v1432 = vsel %vm1176, %v972, %v1368
  %v1433 = vsel %vm1177, %v1021, %v1369
  %v1434 = vsel %vm1178, %v1070, %v1370
  %v1435 = vsel %vm1179, %v1119, %v1371
  %v1436 = vsel %vm1180, %v974, %v1372
  %v1437 = vsel %vm1181, %v1023, %v1373
  %v1438 = vsel %vm1182, %v1072, %v1374
  %v1439 = vsel %vm1183, %v1121, %v1375
  %v1440 = vsel %vm1184, %v977, %v1376
  %v1441 = vsel %vm1185, %v1026, %v1377
  %v1442 = vsel %vm1186, %v1075, %v1378
  %v1443 = vsel %vm1187, %v1124, %v1379
  %v1444 = vsel %vm1188, %v979, %v1380
  %v1445 = vsel %vm1189, %v1028, %v1381
  %v1446 = vsel %vm1190, %v1077, %v1382
  %v1447 = vsel %vm1191, %v1126, %v1383
  %s1448 = scalar_lea.vmem %s2, 64
  %v1449 = vld [vmem:[%s1448] sm:$0xf]
  %v1450 = vld [vmem:[%s1448 + $0x4] sm:$0xf]
  %v1451 = vld [vmem:[%s1448 + $0x8] sm:$0xf]
  %v1452 = vld [vmem:[%s1448 + $0xc] sm:$0xf]
  %v1453 = vld [vmem:[%s1448 + $0x10] sm:$0xf]
  %v1454 = vld [vmem:[%s1448 + $0x14] sm:$0xf]
  %v1455 = vld [vmem:[%s1448 + $0x18] sm:$0xf]
  %v1456 = vld [vmem:[%s1448 + $0x1c] sm:$0xf]
  %v1457 = vld [vmem:[%s1448 + $0x20] sm:$0xf]
  %v1458 = vld [vmem:[%s1448 + $0x24] sm:$0xf]
  %v1459 = vld [vmem:[%s1448 + $0x28] sm:$0xf]
  %v1460 = vld [vmem:[%s1448 + $0x2c] sm:$0xf]
  %v1461 = vld [vmem:[%s1448 + $0x30] sm:$0xf]
  %v1462 = vld [vmem:[%s1448 + $0x34] sm:$0xf]
  %v1463 = vld [vmem:[%s1448 + $0x38] sm:$0xf]
  %v1464 = vld [vmem:[%s1448 + $0x3c] sm:$0xf]
  %v1465 = vpack.c.bf16 %v1388, %v1384
  %v1466 = vpack.c.bf16 %v1389, %v1385
  %v1467 = vpack.c.bf16 %v1390, %v1386
  %v1468 = vpack.c.bf16 %v1391, %v1387
  %v1469 = vpack.c.bf16 %v1396, %v1392
  %v1470 = vpack.c.bf16 %v1397, %v1393
  %v1471 = vpack.c.bf16 %v1398, %v1394
  %v1472 = vpack.c.bf16 %v1399, %v1395
  %v1473 = vpack.c.bf16 %v1404, %v1400
  %v1474 = vpack.c.bf16 %v1405, %v1401
  %v1475 = vpack.c.bf16 %v1406, %v1402
  %v1476 = vpack.c.bf16 %v1407, %v1403
  %v1477 = vpack.c.bf16 %v1412, %v1408
  %v1478 = vpack.c.bf16 %v1413, %v1409
  %v1479 = vpack.c.bf16 %v1414, %v1410
  %v1480 = vpack.c.bf16 %v1415, %v1411
  %v1481 = vpack.c.bf16 %v1420, %v1416
  %v1482 = vpack.c.bf16 %v1421, %v1417
  %v1483 = vpack.c.bf16 %v1422, %v1418
  %v1484 = vpack.c.bf16 %v1423, %v1419
  %v1485 = vpack.c.bf16 %v1428, %v1424
  %v1486 = vpack.c.bf16 %v1429, %v1425
  %v1487 = vpack.c.bf16 %v1430, %v1426
  %v1488 = vpack.c.bf16 %v1431, %v1427
  %v1489 = vpack.c.bf16 %v1436, %v1432
  %v1490 = vpack.c.bf16 %v1437, %v1433
  %v1491 = vpack.c.bf16 %v1438, %v1434
  %v1492 = vpack.c.bf16 %v1439, %v1435
  %v1493 = vpack.c.bf16 %v1444, %v1440
  %v1494 = vpack.c.bf16 %v1445, %v1441
  %v1495 = vpack.c.bf16 %v1446, %v1442
  %v1496 = vpack.c.bf16 %v1447, %v1443
  %s1497 = scalar_lea.vmem %s4, 256
  %v1498 = vld [vmem:[%s1497] sm:$0xff]
  %v1499 = vld [vmem:[%s1497 + $0x8] sm:$0xff]
  %v1500 = vld [vmem:[%s1497 + $0x10] sm:$0xff]
  %v1501 = vld [vmem:[%s1497 + $0x18] sm:$0xff]
  %v1502 = vld [vmem:[%s1497 + $0x20] sm:$0xff]
  %v1503 = vld [vmem:[%s1497 + $0x28] sm:$0xff]
  %v1504 = vld [vmem:[%s1497 + $0x30] sm:$0xff]
  %v1505 = vld [vmem:[%s1497 + $0x38] sm:$0xff]
  %v1506 = vld [vmem:[%s1497 + $0x40] sm:$0xff]
  %v1507 = vld [vmem:[%s1497 + $0x48] sm:$0xff]
  %v1508 = vld [vmem:[%s1497 + $0x50] sm:$0xff]
  %v1509 = vld [vmem:[%s1497 + $0x58] sm:$0xff]
  %v1510 = vld [vmem:[%s1497 + $0x60] sm:$0xff]
  %v1511 = vld [vmem:[%s1497 + $0x68] sm:$0xff]
  %v1512 = vld [vmem:[%s1497 + $0x70] sm:$0xff]
  %v1513 = vld [vmem:[%s1497 + $0x78] sm:$0xff]
  %1515 = vset.pattern.permute.xlu0 0
  %1516 = vperm.xlu0 %1515, %v1498
  %v1517 = vpop.permute.xlu0 %1516
  %1520 = vset.pattern.permute.xlu0 0
  %1521 = vperm.xlu0 %1520, %v1499
  %v1522 = vpop.permute.xlu0 %1521
  %1524 = vset.pattern.permute.xlu0 0
  %1525 = vperm.xlu0 %1524, %v1500
  %v1526 = vpop.permute.xlu0 %1525
  %1528 = vset.pattern.permute.xlu0 0
  %1529 = vperm.xlu0 %1528, %v1501
  %v1530 = vpop.permute.xlu0 %1529
  %1532 = vset.pattern.permute.xlu0 0
  %1533 = vperm.xlu0 %1532, %v1502
  %v1534 = vpop.permute.xlu0 %1533
  %1536 = vset.pattern.permute.xlu0 0
  %1537 = vperm.xlu0 %1536, %v1503
  %v1538 = vpop.permute.xlu0 %1537
  %1540 = vset.pattern.permute.xlu0 0
  %1541 = vperm.xlu0 %1540, %v1504
  %v1542 = vpop.permute.xlu0 %1541
  %1544 = vset.pattern.permute.xlu0 0
  %1545 = vperm.xlu0 %1544, %v1505
  %v1546 = vpop.permute.xlu0 %1545
  %1548 = vset.pattern.permute.xlu0 0
  %1549 = vperm.xlu0 %1548, %v1506
  %v1550 = vpop.permute.xlu0 %1549
  %1552 = vset.pattern.permute.xlu0 0
  %1553 = vperm.xlu0 %1552, %v1507
  %v1554 = vpop.permute.xlu0 %1553
  %1556 = vset.pattern.permute.xlu0 0
  %1557 = vperm.xlu0 %1556, %v1508
  %v1558 = vpop.permute.xlu0 %1557
  %1560 = vset.pattern.permute.xlu0 0
  %1561 = vperm.xlu0 %1560, %v1509
  %v1562 = vpop.permute.xlu0 %1561
  %1564 = vset.pattern.permute.xlu0 0
  %1565 = vperm.xlu0 %1564, %v1510
  %v1566 = vpop.permute.xlu0 %1565
  %1568 = vset.pattern.permute.xlu0 0
  %1569 = vperm.xlu0 %1568, %v1511
  %v1570 = vpop.permute.xlu0 %1569
  %1572 = vset.pattern.permute.xlu0 0
  %1573 = vperm.xlu0 %1572, %v1512
  %v1574 = vpop.permute.xlu0 %1573
  %1576 = vset.pattern.permute.xlu0 0
  %1577 = vperm.xlu0 %1576, %v1513
  %v1578 = vpop.permute.xlu0 %1577
  %v1595 = vunpack.c.l.b16 %v1449
  %v1596 = vunpack.c.l.b16 %v1450
  %v1597 = vunpack.c.l.b16 %v1451
  %v1598 = vunpack.c.l.b16 %v1452
  %v1599 = vunpack.c.l.b16 %v1453
  %v1600 = vunpack.c.l.b16 %v1454
  %v1601 = vunpack.c.l.b16 %v1455
  %v1602 = vunpack.c.l.b16 %v1456
  %v1603 = vunpack.c.l.b16 %v1457
  %v1604 = vunpack.c.l.b16 %v1458
  %v1605 = vunpack.c.l.b16 %v1459
  %v1606 = vunpack.c.l.b16 %v1460
  %v1607 = vunpack.c.l.b16 %v1461
  %v1608 = vunpack.c.l.b16 %v1462
  %v1609 = vunpack.c.l.b16 %v1463
  %v1610 = vunpack.c.l.b16 %v1464
  %v1611 = vpack.c.b16 %v1596, %v1595
  %v1612 = vpack.c.b16 %v1598, %v1597
  %v1613 = vpack.c.b16 %v1600, %v1599
  %v1614 = vpack.c.b16 %v1602, %v1601
  %v1615 = vpack.c.b16 %v1604, %v1603
  %v1616 = vpack.c.b16 %v1606, %v1605
  %v1617 = vpack.c.b16 %v1608, %v1607
  %v1618 = vpack.c.b16 %v1610, %v1609
  %1627 = vmatpush.bf16.msra.mxu0 %v1493
  %1628 = vmatpush.bf16.msra.mxu0 %v1489
  %1629 = vmatpush.bf16.msra.mxu0 %v1485
  %1630 = vmatpush.bf16.msra.mxu0 %v1481
  %1631 = vmatpush.bf16.msra.mxu0 %v1477
  %1632 = vmatpush.bf16.msra.mxu0 %v1473
  %1633 = vmatpush.bf16.msra.mxu0 %v1469
  %1634 = vmatpush.bf16.msra.mxu0 %v1465
  %1635 = vmatmul.bf16.gmra.mxu0 %v1611
  %v1636 = vpop.f32.mrf.mxu0
  %v1637 = vadd.f32 %v1517, %v1636
  %v1638 = vpop.f32.mrf.mxu0
  %1639 = vmatmul.bf16.gmra.mxu0 %v1612
  %v1640 = vpop.f32.mrf.mxu0
  %v1641 = vpop.f32.mrf.mxu0
  %1642 = vmatmul.bf16.gmra.mxu0 %v1613
  %v1643 = vpop.f32.mrf.mxu0
  %v1644 = vpop.f32.mrf.mxu0
  %1645 = vmatmul.bf16.gmra.mxu0 %v1614
  %v1646 = vpop.f32.mrf.mxu0
  %v1647 = vpop.f32.mrf.mxu0
  %1648 = vmatmul.bf16.gmra.mxu0 %v1615
  %v1649 = vpop.f32.mrf.mxu0
  %v1650 = vpop.f32.mrf.mxu0
  %1651 = vmatmul.bf16.gmra.mxu0 %v1616
  %v1652 = vpop.f32.mrf.mxu0
  %v1653 = vpop.f32.mrf.mxu0
  %1654 = vmatmul.bf16.gmra.mxu0 %v1617
  %v1655 = vpop.f32.mrf.mxu0
  %v1656 = vpop.f32.mrf.mxu0
  %1657 = vmatmul.bf16.gmra.mxu0 %v1618
  %v1658 = vpop.f32.mrf.mxu0
  %v1659 = vpop.f32.mrf.mxu0
  %1660 = vdwg.mxu0
  %1661 = vmatpush.bf16.msra.mxu0 %v1494
  %1662 = vmatpush.bf16.msra.mxu0 %v1490
  %1663 = vmatpush.bf16.msra.mxu0 %v1486
  %1664 = vmatpush.bf16.msra.mxu0 %v1482
  %1665 = vmatpush.bf16.msra.mxu0 %v1478
  %1666 = vmatpush.bf16.msra.mxu0 %v1474
  %1667 = vmatpush.bf16.msra.mxu0 %v1470
  %1668 = vmatpush.bf16.msra.mxu0 %v1466
  %1669 = vmatmul.bf16.gmra.mxu0 %v1611
  %v1670 = vpop.f32.mrf.mxu0
  %v1671 = vadd.f32 %v1517, %v1670
  %v1672 = vpop.f32.mrf.mxu0
  %1673 = vmatmul.bf16.gmra.mxu0 %v1612
  %v1674 = vpop.f32.mrf.mxu0
  %v1675 = vpop.f32.mrf.mxu0
  %1676 = vmatmul.bf16.gmra.mxu0 %v1613
  %v1677 = vpop.f32.mrf.mxu0
  %v1678 = vpop.f32.mrf.mxu0
  %1679 = vmatmul.bf16.gmra.mxu0 %v1614
  %v1680 = vpop.f32.mrf.mxu0
  %v1681 = vpop.f32.mrf.mxu0
  %1682 = vmatmul.bf16.gmra.mxu0 %v1615
  %v1683 = vpop.f32.mrf.mxu0
  %v1684 = vpop.f32.mrf.mxu0
  %1685 = vmatmul.bf16.gmra.mxu0 %v1616
  %v1686 = vpop.f32.mrf.mxu0
  %v1687 = vpop.f32.mrf.mxu0
  %1688 = vmatmul.bf16.gmra.mxu0 %v1617
  %v1689 = vpop.f32.mrf.mxu0
  %v1690 = vpop.f32.mrf.mxu0
  %1691 = vmatmul.bf16.gmra.mxu0 %v1618
  %v1692 = vpop.f32.mrf.mxu0
  %v1693 = vpop.f32.mrf.mxu0
  %1694 = vdwg.mxu0
  %1695 = vmatpush.bf16.msra.mxu0 %v1495
  %1696 = vmatpush.bf16.msra.mxu0 %v1491
  %1697 = vmatpush.bf16.msra.mxu0 %v1487
  %1698 = vmatpush.bf16.msra.mxu0 %v1483
  %1699 = vmatpush.bf16.msra.mxu0 %v1479
  %1700 = vmatpush.bf16.msra.mxu0 %v1475
  %1701 = vmatpush.bf16.msra.mxu0 %v1471
  %1702 = vmatpush.bf16.msra.mxu0 %v1467
  %1703 = vmatmul.bf16.gmra.mxu0 %v1611
  %v1704 = vpop.f32.mrf.mxu0
  %v1705 = vadd.f32 %v1517, %v1704
  %v1706 = vpop.f32.mrf.mxu0
  %1707 = vmatmul.bf16.gmra.mxu0 %v1612
  %v1708 = vpop.f32.mrf.mxu0
  %v1709 = vpop.f32.mrf.mxu0
  %1710 = vmatmul.bf16.gmra.mxu0 %v1613
  %v1711 = vpop.f32.mrf.mxu0
  %v1712 = vpop.f32.mrf.mxu0
  %1713 = vmatmul.bf16.gmra.mxu0 %v1614
  %v1714 = vpop.f32.mrf.mxu0
  %v1715 = vpop.f32.mrf.mxu0
  %1716 = vmatmul.bf16.gmra.mxu0 %v1615
  %v1717 = vpop.f32.mrf.mxu0
  %v1718 = vpop.f32.mrf.mxu0
  %1719 = vmatmul.bf16.gmra.mxu0 %v1616
  %v1720 = vpop.f32.mrf.mxu0
  %v1721 = vpop.f32.mrf.mxu0
  %1722 = vmatmul.bf16.gmra.mxu0 %v1617
  %v1723 = vpop.f32.mrf.mxu0
  %v1724 = vpop.f32.mrf.mxu0
  %1725 = vmatmul.bf16.gmra.mxu0 %v1618
  %v1726 = vpop.f32.mrf.mxu0
  %v1727 = vpop.f32.mrf.mxu0
  %1728 = vdwg.mxu0
  %1729 = vmatpush.bf16.msra.mxu0 %v1496
  %1730 = vmatpush.bf16.msra.mxu0 %v1492
  %1731 = vmatpush.bf16.msra.mxu0 %v1488
  %1732 = vmatpush.bf16.msra.mxu0 %v1484
  %1733 = vmatpush.bf16.msra.mxu0 %v1480
  %1734 = vmatpush.bf16.msra.mxu0 %v1476
  %1735 = vmatpush.bf16.msra.mxu0 %v1472
  %1736 = vmatpush.bf16.msra.mxu0 %v1468
  %1737 = vmatmul.bf16.gmra.mxu0 %v1611
  %v1738 = vpop.f32.mrf.mxu0
  %v1739 = vadd.f32 %v1517, %v1738
  %v1740 = vpop.f32.mrf.mxu0
  %1741 = vmatmul.bf16.gmra.mxu0 %v1612
  %v1742 = vpop.f32.mrf.mxu0
  %v1743 = vpop.f32.mrf.mxu0
  %1744 = vmatmul.bf16.gmra.mxu0 %v1613
  %v1745 = vpop.f32.mrf.mxu0
  %v1746 = vpop.f32.mrf.mxu0
  %1747 = vmatmul.bf16.gmra.mxu0 %v1614
  %v1748 = vpop.f32.mrf.mxu0
  %v1749 = vpop.f32.mrf.mxu0
  %1750 = vmatmul.bf16.gmra.mxu0 %v1615
  %v1751 = vpop.f32.mrf.mxu0
  %v1752 = vpop.f32.mrf.mxu0
  %1753 = vmatmul.bf16.gmra.mxu0 %v1616
  %v1754 = vpop.f32.mrf.mxu0
  %v1755 = vpop.f32.mrf.mxu0
  %1756 = vmatmul.bf16.gmra.mxu0 %v1617
  %v1757 = vpop.f32.mrf.mxu0
  %v1758 = vpop.f32.mrf.mxu0
  %1759 = vmatmul.bf16.gmra.mxu0 %v1618
  %v1760 = vpop.f32.mrf.mxu0
  %v1761 = vpop.f32.mrf.mxu0
  %1762 = vdwg.mxu0
  %vm1763 = vcmp.gt.f32.partialorder %v1637, 0.0
  %vm1764 = vcmp.gt.f32.partialorder %v1671, 0.0
  %vm1765 = vcmp.gt.f32.partialorder %v1705, 0.0
  %vm1766 = vcmp.gt.f32.partialorder %v1739, 0.0
  %v1767 = vmul.f32 %v1637, 1.442695
  %v1768 = vpow.pop %v1767
  %v1769 = vmul.f32 %v1671, 1.442695
  %v1770 = vpow.pop %v1769
  %v1771 = vmul.f32 %v1705, 1.442695
  %v1772 = vpow.pop %v1771
  %v1773 = vmul.f32 %v1739, 1.442695
  %v1774 = vpow.pop %v1773
  %v1775 = vsub.f32 %v1768, 1.0
  %v1776 = vsub.f32 %v1770, 1.0
  %v1777 = vsub.f32 %v1772, 1.0
  %v1778 = vsub.f32 %v1774, 1.0
  %v1779 = vsel %vm1763, %v1637, %v1775
  %v1780 = vsel %vm1764, %v1671, %v1776
  %v1781 = vsel %vm1765, %v1705, %v1777
  %v1782 = vsel %vm1766, %v1739, %v1778
  %v1783 = vld [vmem:[%s3] sm:$0xff]
  %1785 = vset.pattern.permute.xlu0 0
  %1786 = vperm.xlu0 %1785, %v1783
  %v1787 = vpop.permute.xlu0 %1786
  %v1789 = vmul.f32 %v1779, %v1787
  %v1790 = vmul.f32 %v1780, %v1787
  %v1791 = vmul.f32 %v1781, %v1787
  %v1792 = vmul.f32 %v1782, %v1787
  %v1793 = vrot.slane %v1789, 4
  %v1794 = vadd.f32 %v1789, %v1793
  %v1795 = vrot.slane %v1794, 2
  %v1796 = vadd.f32 %v1794, %v1795
  %v1797 = vrot.slane %v1796, 1
  %v1798 = vadd.f32 %v1796, %v1797
  %v1799 = vrot.slane %v1790, 4
  %v1800 = vadd.f32 %v1790, %v1799
  %v1801 = vrot.slane %v1800, 2
  %v1802 = vadd.f32 %v1800, %v1801
  %v1803 = vrot.slane %v1802, 1
  %v1804 = vadd.f32 %v1802, %v1803
  %v1805 = vrot.slane %v1791, 4
  %v1806 = vadd.f32 %v1791, %v1805
  %v1807 = vrot.slane %v1806, 2
  %v1808 = vadd.f32 %v1806, %v1807
  %v1809 = vrot.slane %v1808, 1
  %v1810 = vadd.f32 %v1808, %v1809
  %v1811 = vrot.slane %v1792, 4
  %v1812 = vadd.f32 %v1792, %v1811
  %v1813 = vrot.slane %v1812, 2
  %v1814 = vadd.f32 %v1812, %v1813
  %v1815 = vrot.slane %v1814, 1
  %v1816 = vadd.f32 %v1814, %v1815
  %s1817 = scalar_lea.vmem %s4, 384
  %v1818 = vld [vmem:[%s1817] sm:$0xff]
  %1820 = vset.pattern.permute.xlu0 0
  %1821 = vperm.xlu0 %1820, %v1818
  %v1822 = vpop.permute.xlu0 %1821
  %v1824 = vadd.f32 %v1798, %v1822
  %v1825 = vadd.f32 %v1804, %v1822
  %v1826 = vadd.f32 %v1810, %v1822
  %v1827 = vadd.f32 %v1816, %v1822
  %vm1828 = vcmp.gt.f32.partialorder %v1824, 0.0
  %vm1829 = vcmp.gt.f32.partialorder %v1825, 0.0
  %vm1830 = vcmp.gt.f32.partialorder %v1826, 0.0
  %vm1831 = vcmp.gt.f32.partialorder %v1827, 0.0
  %v1832 = vmul.f32 %v1824, 1.442695
  %v1833 = vpow.pop %v1832
  %v1834 = vmul.f32 %v1825, 1.442695
  %v1835 = vpow.pop %v1834
  %v1836 = vmul.f32 %v1826, 1.442695
  %v1837 = vpow.pop %v1836
  %v1838 = vmul.f32 %v1827, 1.442695
  %v1839 = vpow.pop %v1838
  %v1840 = vsub.f32 %v1833, 1.0
  %v1841 = vsub.f32 %v1835, 1.0
  %v1842 = vsub.f32 %v1837, 1.0
  %v1843 = vsub.f32 %v1839, 1.0
  %v1844 = vsel %vm1828, %v1824, %v1840
  %v1845 = vsel %vm1829, %v1825, %v1841
  %v1846 = vsel %vm1830, %v1826, %v1842
  %v1847 = vsel %vm1831, %v1827, %v1843
  %v1852 = vrot.slane %v1845, 7
  %v1853 = vrot.slane %v1846, 6
  %v1854 = vrot.slane %v1847, 5
  %vm1855 = vcmask 1040384
  %v1856 = vsel %vm1855, %v1844, %v1852
  %vm1857 = vcmask 1042434
  %v1858 = vsel %vm1857, %v1853, %v1854
  %vm1859 = vcmask 1041408
  %v1860 = vsel %vm1859, %v1856, %v1858
  %v1862 = vlaneseq
  %vm1863 = vcmp.ge.s32.totalorder %v1862, 0
  %vm1864 = vcmp.lt.s32.totalorder %v1862, 512
  %vm1865 = vmand %vm1863, %vm1864
  %1866 = vst.msk [vmem:[%s5] sm:$0xf] %vm1865, %v1860
  // Predicated region
  $region22: #{_forward.1} parent=0 // pred_check
    _
  $region23: #{_forward.1} parent=0 // pred_check_branch
    %1868 = sbr.rel (0) target = $region25
  $region24: #{_forward.1} parent=0 // pred_region
    _
  $region25: #{_forward.1} parent=0 // pred_fallthru
    _
  // Predicated region
  $region26: #{_forward.1} parent=0 // pred_check
    _
  $region27: #{_forward.1} parent=0 // pred_check_branch
    %1870 = sbr.rel (0) target = $region29
  $region28: #{_forward.1} parent=0 // pred_region
    _
  $region29: #{_forward.1} parent=0 // pred_fallthru
    _

</llo_original>
